<compile_context>
chip_gen: v7x
topology: tpu7x:2x2x1
jax: 0.10.0
libtpu: 0.0.40
codegen_flags: <defaults>
</compile_context>

<pallas_src>
import jax
import jax.numpy as jnp
from jax import lax
from jax.experimental import pallas as pl
from jax.experimental.pallas import tpu as pltpu

HIDDEN = 24
FEATURE = 1
GATE = 128      # lane stride per gate: r -> lanes [0,128), z -> [128,256), n -> [256,384)
HP = 128        # padded hidden / output lane width (unmasked stores, lane-dense out)
GROUP = 8       # timesteps per inner-loop group (one sublane tile)


def gru_linear_kernel(x_ref,        # (TS, 1)    last-batch-row inputs for this time chunk
                      wih_ref,      # (1, 3G)    W_ih[:, 0] lane-packed (FEATURE == 1)
                      bih_ref,      # (1, 3G)    b_ih lane-packed
                      whh_ref,      # (H, 3G)    W_hh^T lane-packed, gate blocks [r | z | n]
                      bhh_ref,      # (1, 3G)    b_hh lane-packed
                      wlin_ref,     # (HP, HP)   Linear weight^T, zero-padded to 128x128
                      blin_ref,     # (1, HP)    Linear bias, zero-padded
                      out_ref,      # (TS, HP)   output chunk (also used as hidden staging)
                      h_ref):       # (1, HP)    carried hidden state (persists across chunks)
    TS = x_ref.shape[0]
    H = HIDDEN
    G = GATE

    # h_0 = 0 (PyTorch default), only at the first time chunk.
    @pl.when(pl.program_id(0) == 0)
    def _():
        h_ref[...] = jnp.zeros(h_ref.shape, h_ref.dtype)

    # Hoist loop-invariant weights/biases (whh is only 9 vregs after packing).
    wih = wih_ref[...]                                              # (1, 3G)
    bih = bih_ref[...]                                              # (1, 3G)
    whh = whh_ref[...]                                              # (H, 3G)
    bhh = bhh_ref[...]                                              # (1, 3G)

    n_groups = TS // GROUP

    def group_body(gidx, h):                                        # h: (1, HP)
        base = pl.multiple_of(gidx * GROUP, GROUP)
        # Input projection for the whole group at once (broadcast FMA, FEATURE == 1);
        # independent of h, so it is off the serial critical path.
        gi_g = x_ref[pl.ds(base, GROUP), :] * wih + bih             # (GROUP, 3G)
        rows = []
        for i in range(GROUP):                                      # static 8-step unroll
            gi = gi_g[i:i + 1, :]                                   # (1, 3G)
            # Single fused hidden matmul per step; contraction over the real 24 lanes.
            gh = jnp.dot(h[:, :H], whh,
                         preferred_element_type=jnp.float32) + bhh  # (1, 3G)
            s = gi + gh
            rz = jax.nn.sigmoid(s[:, :2 * G])                       # lanes [0,256): r|z
            r = rz[:, :G]                                           # whole-vreg slice
            z = rz[:, G:]                                           # whole-vreg slice
            n = jnp.tanh(gi[:, 2 * G:] + r * gh[:, 2 * G:])         # whole-vreg slices
            h = (1.0 - z) * n + z * h                               # (1, HP); pad lanes stay 0
            rows.append(h)
        # One unmasked (8, 128) store per group instead of 8 masked single-row stores.
        out_ref[pl.ds(base, GROUP), :] = jnp.concatenate(rows, axis=0)
        return h

    if n_groups <= 4:
        unroll = n_groups
    elif n_groups % 2 == 0:
        unroll = 2
    else:
        unroll = 1
    h_final = lax.fori_loop(0, n_groups, group_body, h_ref[...], unroll=unroll)
    h_ref[...] = h_final

    # Final Linear on the whole chunk, in place in the output block:
    # (TS, HP) @ (HP, HP) + (1, HP); padded rows/cols of wlin are zero.
    out_ref[...] = (jnp.dot(out_ref[...], wlin_ref[...],
                            preferred_element_type=jnp.float32) + blin_ref[...])


def nn_forward(x, params):
    """x: (seq_len, batch, feature) float32 -> (seq_len, 24) float32."""
    W_ih, W_hh, b_ih, b_hh, W_lin, b_lin = params
    S, B, _ = x.shape
    H = HIDDEN
    G = GATE

    # Only the LAST batch row feeds the output (torch `x_[:, -1, :]`); the GRU
    # processes batch rows independently, so the rest is dead compute -> drop it.
    x_last = x[:, B - 1, :].astype(jnp.float32)                     # (S, 1)

    # --- Lane-aligned gate packing: r -> lanes [0,H), z -> [G,G+H), n -> [2G,2G+H).
    def pack_row(v):                                                # (3H,) -> (1, 3G)
        o = jnp.zeros((1, 3 * G), jnp.float32)
        o = o.at[0, 0:H].set(v[0:H])
        o = o.at[0, G:G + H].set(v[H:2 * H])
        o = o.at[0, 2 * G:2 * G + H].set(v[2 * H:3 * H])
        return o

    whh_t = W_hh.T.astype(jnp.float32)                              # (H, 3H), cols [r|z|n]
    whh_pack = jnp.zeros((H, 3 * G), jnp.float32)
    whh_pack = whh_pack.at[:, 0:H].set(whh_t[:, 0:H])
    whh_pack = whh_pack.at[:, G:G + H].set(whh_t[:, H:2 * H])
    whh_pack = whh_pack.at[:, 2 * G:2 * G + H].set(whh_t[:, 2 * H:3 * H])

    wih_pack = pack_row(W_ih[:, 0].astype(jnp.float32))
    bih_pack = pack_row(b_ih.astype(jnp.float32))
    bhh_pack = pack_row(b_hh.astype(jnp.float32))

    wlin_pack = jnp.zeros((HP, HP), jnp.float32).at[:H, :H].set(W_lin.T.astype(jnp.float32))
    blin_pack = jnp.zeros((1, HP), jnp.float32).at[0, :H].set(b_lin.astype(jnp.float32))

    # --- Time-axis chunking. Per-chunk VMEM is ~TS KiB (x + out tiles, double
    # buffered), so TS = 1024 is ~2 MiB -- far below VMEM on every generation.
    # Chunk size is balanced across chunks so tail padding is < 8 steps/chunk.
    def cdiv(a, b):
        return (a + b - 1) // b

    MAX_TS = 1024
    s_pad8 = cdiv(S, GROUP) * GROUP
    n_chunks = cdiv(s_pad8, MAX_TS)
    TS = cdiv(cdiv(s_pad8, n_chunks), GROUP) * GROUP
    S_pad = TS * n_chunks
    if S_pad != S:
        x_last = jnp.pad(x_last, ((0, S_pad - S), (0, 0)))

    out = pl.pallas_call(
        gru_linear_kernel,
        out_shape=jax.ShapeDtypeStruct((S_pad, HP), jnp.float32),
        grid=(n_chunks,),
        in_specs=[
            pl.BlockSpec((TS, 1), lambda c: (c, 0)),                # x chunk
            pl.BlockSpec((1, 3 * G), lambda c: (0, 0)),             # W_ih row (packed)
            pl.BlockSpec((1, 3 * G), lambda c: (0, 0)),             # b_ih (packed)
            pl.BlockSpec((H, 3 * G), lambda c: (0, 0)),             # W_hh^T (packed)
            pl.BlockSpec((1, 3 * G), lambda c: (0, 0)),             # b_hh (packed)
            pl.BlockSpec((HP, HP), lambda c: (0, 0)),               # W_lin^T (padded)
            pl.BlockSpec((1, HP), lambda c: (0, 0)),                # b_lin (padded)
        ],
        out_specs=pl.BlockSpec((TS, HP), lambda c: (c, 0)),
        scratch_shapes=[
            pltpu.VMEM((1, HP), jnp.float32),                       # carried hidden state
        ],
        compiler_params=pltpu.CompilerParams(
            dimension_semantics=("arbitrary",)),                    # sequential carry of h
    )(x_last, wih_pack, bih_pack, whh_pack, bhh_pack, wlin_pack, blin_pack)
    return out[:S, :H]


def init_params(key):
    """Deterministic init mirroring the torch module's parameter shapes."""
    H = HIDDEN
    k = 1.0 / jnp.sqrt(jnp.float32(H))
    keys = jax.random.split(key, 6)
    W_ih = jax.random.uniform(keys[0], (3 * H, FEATURE), jnp.float32, -k, k)
    W_hh = jax.random.uniform(keys[1], (3 * H, H), jnp.float32, -k, k)
    b_ih = jax.random.uniform(keys[2], (3 * H,), jnp.float32, -k, k)
    b_hh = jax.random.uniform(keys[3], (3 * H,), jnp.float32, -k, k)
    W_lin = jax.random.uniform(keys[4], (H, H), jnp.float32, -k, k)
    b_lin = jax.random.uniform(keys[5], (H,), jnp.float32, -k, k)
    return (W_ih, W_hh, b_ih, b_hh, W_lin, b_lin)


def nn_forward_ref(x, params):
    """Pure-JAX reference with identical PyTorch GRU semantics."""
    W_ih, W_hh, b_ih, b_hh, W_lin, b_lin = params
    S, B, _ = x.shape
    H = HIDDEN
    h = jnp.zeros((B, H), jnp.float32)
    hs = []
    for t in range(S):
        gi = x[t] @ W_ih.T + b_ih
        gh = h @ W_hh.T + b_hh
        r = jax.nn.sigmoid(gi[:, :H] + gh[:, :H])
        z = jax.nn.sigmoid(gi[:, H:2 * H] + gh[:, H:2 * H])
        n = jnp.tanh(gi[:, 2 * H:] + r * gh[:, 2 * H:])
        h = (1.0 - z) * n + z * h
        hs.append(h)
    hs = jnp.stack(hs, axis=0)        # (S, B, H)
    x_sel = hs[:, -1, :]              # (S, H)  -- last batch element
    return x_sel @ W_lin.T + b_lin


if __name__ == "__main__":
    key = jax.random.PRNGKey(0)
    pkey, xkey = jax.random.split(key)
    params = init_params(pkey)

    S, B = 8, 2
    x = jax.random.normal(xkey, (S, B, FEATURE), jnp.float32)

    out = jax.block_until_ready(nn_forward(x, params))
    ref = nn_forward_ref(x, params)

    assert out.shape == (S, HIDDEN), out.shape
    assert jnp.allclose(out, ref, atol=1e-5, rtol=1e-5), float(jnp.max(jnp.abs(out - ref)))
    print("KERNEL_OK")
</pallas_src>

<mosaic_0001>
module attributes {stable_mosaic.version = 11 : i64} {
  func.func @gru_linear_kernel(%arg0: i32, %arg1: memref<8x1xf32, #tpu.memory_space<vmem>>, %arg2: memref<1x384xf32, #tpu.memory_space<vmem>>, %arg3: memref<1x384xf32, #tpu.memory_space<vmem>>, %arg4: memref<24x384xf32, #tpu.memory_space<vmem>>, %arg5: memref<1x384xf32, #tpu.memory_space<vmem>>, %arg6: memref<128x128xf32, #tpu.memory_space<vmem>>, %arg7: memref<1x128xf32, #tpu.memory_space<vmem>>, %arg8: memref<8x128xf32, #tpu.memory_space<vmem>>, %arg9: memref<1x128xf32, #tpu.memory_space<vmem>>) attributes {dimension_semantics = [#tpu.dimension_semantics<arbitrary>], iteration_bounds = array<i64: 1>, scalar_prefetch = 0 : i64, scratch_operands = 1 : i64, tpu.core_type = #tpu.core_type<tc>, window_params = [{transform_indices = @transform_0, window_bounds = array<i64: 8, 1>}, {pipeline_mode = #tpu.pipeline_mode<synchronous>, transform_indices = @transform_1, window_bounds = array<i64: 1, 384>}, {pipeline_mode = #tpu.pipeline_mode<synchronous>, transform_indices = @transform_2, window_bounds = array<i64: 1, 384>}, {pipeline_mode = #tpu.pipeline_mode<synchronous>, transform_indices = @transform_3, window_bounds = array<i64: 24, 384>}, {pipeline_mode = #tpu.pipeline_mode<synchronous>, transform_indices = @transform_4, window_bounds = array<i64: 1, 384>}, {pipeline_mode = #tpu.pipeline_mode<synchronous>, transform_indices = @transform_5, window_bounds = array<i64: 128, 128>}, {pipeline_mode = #tpu.pipeline_mode<synchronous>, transform_indices = @transform_6, window_bounds = array<i64: 1, 128>}, {transform_indices = @transform_7, window_bounds = array<i64: 8, 128>}]} {
    %c0_i32 = arith.constant 0 : i32
    %0 = arith.cmpi eq, %arg0, %c0_i32 : i32
    %1 = arith.extui %0 : i1 to i32
    %c0_i32_0 = arith.constant 0 : i32
    %2 = arith.cmpi ne, %1, %c0_i32_0 : i32
    scf.if %2 {
      %cst_47 = arith.constant 0.000000e+00 : f32
      %212 = vector.broadcast %cst_47 : f32 to vector<1x128xf32>
      %c0_48 = arith.constant 0 : index
      %c0_49 = arith.constant 0 : index
      %213 = vector.load %arg9[%c0_48, %c0_49] : memref<1x128xf32, #tpu.memory_space<vmem>>, vector<1x128xf32>
      tpu.vector_store %arg9[%c0_48, %c0_49], %212 {strides = array<i32>} : memref<1x128xf32, #tpu.memory_space<vmem>>, vector<1x128xf32>,
    } else {
    }
    %c0 = arith.constant 0 : index
    %c0_1 = arith.constant 0 : index
    %3 = vector.load %arg2[%c0, %c0_1] : memref<1x384xf32, #tpu.memory_space<vmem>>, vector<1x384xf32>
    %c0_2 = arith.constant 0 : index
    %c0_3 = arith.constant 0 : index
    %4 = vector.load %arg3[%c0_2, %c0_3] : memref<1x384xf32, #tpu.memory_space<vmem>>, vector<1x384xf32>
    %c0_4 = arith.constant 0 : index
    %c0_5 = arith.constant 0 : index
    %5 = vector.load %arg4[%c0_4, %c0_5] : memref<24x384xf32, #tpu.memory_space<vmem>>, vector<24x384xf32>
    %c0_6 = arith.constant 0 : index
    %c0_7 = arith.constant 0 : index
    %6 = vector.load %arg5[%c0_6, %c0_7] : memref<1x384xf32, #tpu.memory_space<vmem>>, vector<1x384xf32>
    %c0_8 = arith.constant 0 : index
    %c0_9 = arith.constant 0 : index
    %7 = vector.load %arg9[%c0_8, %c0_9] : memref<1x128xf32, #tpu.memory_space<vmem>>, vector<1x128xf32>
    %c0_i32_10 = arith.constant 0 : i32
    %c8_i32 = arith.constant 8 : i32
    %8 = arith.muli %c0_i32_10, %c8_i32 : i32
    %9 = tpu.assume_multiple %8, 8 : i32
    %10 = arith.index_cast %9 : i32 to index
    %c0_11 = arith.constant 0 : index
    %11 = vector.load %arg1[%10, %c0_11] : memref<8x1xf32, #tpu.memory_space<vmem>>, vector<8x1xf32>
    %12 = vector.broadcast %11 : vector<8x1xf32> to vector<8x384xf32>
    %13 = vector.broadcast %3 : vector<1x384xf32> to vector<8x384xf32>
    %14 = arith.mulf %12, %13 : vector<8x384xf32>
    %15 = vector.broadcast %4 : vector<1x384xf32> to vector<8x384xf32>
    %16 = arith.addf %14, %15 : vector<8x384xf32>
    %17 = vector.extract_strided_slice %16 {offsets = [0, 0], sizes = [1, 384], strides = [1, 1]} : vector<8x384xf32> to vector<1x384xf32>
    %18 = vector.extract_strided_slice %7 {offsets = [0, 0], sizes = [1, 24], strides = [1, 1]} : vector<1x128xf32> to vector<1x24xf32>
    %cst = arith.constant dense<0.000000e+00> : vector<1x384xf32>
    %19 = tpu.matmul %18, %5, %cst {dimension_numbers = #tpu.dot_dimension_numbers<[1], [0], [0], [1], [0, 0, 1, 1], [], []>} : vector<1x24xf32>, vector<24x384xf32>, vector<1x384xf32> -> vector<1x384xf32>
    %20 = arith.addf %19, %6 : vector<1x384xf32>
    %21 = arith.addf %17, %20 : vector<1x384xf32>
    %22 = vector.extract_strided_slice %21 {offsets = [0, 0], sizes = [1, 256], strides = [1, 1]} : vector<1x384xf32> to vector<1x256xf32>
    %23 = arith.negf %22 : vector<1x256xf32>
    %24 = math.exp %23 : vector<1x256xf32>
    %cst_12 = arith.constant 1.000000e+00 : f32
    %25 = vector.broadcast %cst_12 : f32 to vector<1x256xf32>
    %26 = arith.addf %25, %24 : vector<1x256xf32>
    %27 = arith.divf %25, %26 : vector<1x256xf32>
    %28 = vector.extract_strided_slice %27 {offsets = [0, 0], sizes = [1, 128], strides = [1, 1]} : vector<1x256xf32> to vector<1x128xf32>
    %29 = vector.extract_strided_slice %27 {offsets = [0, 128], sizes = [1, 128], strides = [1, 1]} : vector<1x256xf32> to vector<1x128xf32>
    %30 = vector.extract_strided_slice %17 {offsets = [0, 256], sizes = [1, 128], strides = [1, 1]} : vector<1x384xf32> to vector<1x128xf32>
    %31 = vector.extract_strided_slice %20 {offsets = [0, 256], sizes = [1, 128], strides = [1, 1]} : vector<1x384xf32> to vector<1x128xf32>
    %32 = arith.mulf %28, %31 : vector<1x128xf32>
    %33 = arith.addf %30, %32 : vector<1x128xf32>
    %34 = math.tanh %33 : vector<1x128xf32>
    %cst_13 = arith.constant 1.000000e+00 : f32
    %35 = vector.broadcast %cst_13 : f32 to vector<1x128xf32>
    %36 = arith.subf %35, %29 : vector<1x128xf32>
    %37 = arith.mulf %36, %34 : vector<1x128xf32>
    %38 = arith.mulf %29, %7 : vector<1x128xf32>
    %39 = arith.addf %37, %38 : vector<1x128xf32>
    %40 = vector.extract_strided_slice %16 {offsets = [1, 0], sizes = [1, 384], strides = [1, 1]} : vector<8x384xf32> to vector<1x384xf32>
    %41 = vector.extract_strided_slice %39 {offsets = [0, 0], sizes = [1, 24], strides = [1, 1]} : vector<1x128xf32> to vector<1x24xf32>
    %cst_14 = arith.constant dense<0.000000e+00> : vector<1x384xf32>
    %42 = tpu.matmul %41, %5, %cst_14 {dimension_numbers = #tpu.dot_dimension_numbers<[1], [0], [0], [1], [0, 0, 1, 1], [], []>} : vector<1x24xf32>, vector<24x384xf32>, vector<1x384xf32> -> vector<1x384xf32>
    %43 = arith.addf %42, %6 : vector<1x384xf32>
    %44 = arith.addf %40, %43 : vector<1x384xf32>
    %45 = vector.extract_strided_slice %44 {offsets = [0, 0], sizes = [1, 256], strides = [1, 1]} : vector<1x384xf32> to vector<1x256xf32>
    %46 = arith.negf %45 : vector<1x256xf32>
    %47 = math.exp %46 : vector<1x256xf32>
    %cst_15 = arith.constant 1.000000e+00 : f32
    %48 = vector.broadcast %cst_15 : f32 to vector<1x256xf32>
    %49 = arith.addf %48, %47 : vector<1x256xf32>
    %50 = arith.divf %48, %49 : vector<1x256xf32>
    %51 = vector.extract_strided_slice %50 {offsets = [0, 0], sizes = [1, 128], strides = [1, 1]} : vector<1x256xf32> to vector<1x128xf32>
    %52 = vector.extract_strided_slice %50 {offsets = [0, 128], sizes = [1, 128], strides = [1, 1]} : vector<1x256xf32> to vector<1x128xf32>
    %53 = vector.extract_strided_slice %40 {offsets = [0, 256], sizes = [1, 128], strides = [1, 1]} : vector<1x384xf32> to vector<1x128xf32>
    %54 = vector.extract_strided_slice %43 {offsets = [0, 256], sizes = [1, 128], strides = [1, 1]} : vector<1x384xf32> to vector<1x128xf32>
    %55 = arith.mulf %51, %54 : vector<1x128xf32>
    %56 = arith.addf %53, %55 : vector<1x128xf32>
    %57 = math.tanh %56 : vector<1x128xf32>
    %cst_16 = arith.constant 1.000000e+00 : f32
    %58 = vector.broadcast %cst_16 : f32 to vector<1x128xf32>
    %59 = arith.subf %58, %52 : vector<1x128xf32>
    %60 = arith.mulf %59, %57 : vector<1x128xf32>
    %61 = arith.mulf %52, %39 : vector<1x128xf32>
    %62 = arith.addf %60, %61 : vector<1x128xf32>
    %63 = vector.extract_strided_slice %16 {offsets = [2, 0], sizes = [1, 384], strides = [1, 1]} : vector<8x384xf32> to vector<1x384xf32>
    %64 = vector.extract_strided_slice %62 {offsets = [0, 0], sizes = [1, 24], strides = [1, 1]} : vector<1x128xf32> to vector<1x24xf32>
    %cst_17 = arith.constant dense<0.000000e+00> : vector<1x384xf32>
    %65 = tpu.matmul %64, %5, %cst_17 {dimension_numbers = #tpu.dot_dimension_numbers<[1], [0], [0], [1], [0, 0, 1, 1], [], []>} : vector<1x24xf32>, vector<24x384xf32>, vector<1x384xf32> -> vector<1x384xf32>
    %66 = arith.addf %65, %6 : vector<1x384xf32>
    %67 = arith.addf %63, %66 : vector<1x384xf32>
    %68 = vector.extract_strided_slice %67 {offsets = [0, 0], sizes = [1, 256], strides = [1, 1]} : vector<1x384xf32> to vector<1x256xf32>
    %69 = arith.negf %68 : vector<1x256xf32>
    %70 = math.exp %69 : vector<1x256xf32>
    %cst_18 = arith.constant 1.000000e+00 : f32
    %71 = vector.broadcast %cst_18 : f32 to vector<1x256xf32>
    %72 = arith.addf %71, %70 : vector<1x256xf32>
    %73 = arith.divf %71, %72 : vector<1x256xf32>
    %74 = vector.extract_strided_slice %73 {offsets = [0, 0], sizes = [1, 128], strides = [1, 1]} : vector<1x256xf32> to vector<1x128xf32>
    %75 = vector.extract_strided_slice %73 {offsets = [0, 128], sizes = [1, 128], strides = [1, 1]} : vector<1x256xf32> to vector<1x128xf32>
    %76 = vector.extract_strided_slice %63 {offsets = [0, 256], sizes = [1, 128], strides = [1, 1]} : vector<1x384xf32> to vector<1x128xf32>
    %77 = vector.extract_strided_slice %66 {offsets = [0, 256], sizes = [1, 128], strides = [1, 1]} : vector<1x384xf32> to vector<1x128xf32>
    %78 = arith.mulf %74, %77 : vector<1x128xf32>
    %79 = arith.addf %76, %78 : vector<1x128xf32>
    %80 = math.tanh %79 : vector<1x128xf32>
    %cst_19 = arith.constant 1.000000e+00 : f32
    %81 = vector.broadcast %cst_19 : f32 to vector<1x128xf32>
    %82 = arith.subf %81, %75 : vector<1x128xf32>
    %83 = arith.mulf %82, %80 : vector<1x128xf32>
    %84 = arith.mulf %75, %62 : vector<1x128xf32>
    %85 = arith.addf %83, %84 : vector<1x128xf32>
    %86 = vector.extract_strided_slice %16 {offsets = [3, 0], sizes = [1, 384], strides = [1, 1]} : vector<8x384xf32> to vector<1x384xf32>
    %87 = vector.extract_strided_slice %85 {offsets = [0, 0], sizes = [1, 24], strides = [1, 1]} : vector<1x128xf32> to vector<1x24xf32>
    %cst_20 = arith.constant dense<0.000000e+00> : vector<1x384xf32>
    %88 = tpu.matmul %87, %5, %cst_20 {dimension_numbers = #tpu.dot_dimension_numbers<[1], [0], [0], [1], [0, 0, 1, 1], [], []>} : vector<1x24xf32>, vector<24x384xf32>, vector<1x384xf32> -> vector<1x384xf32>
    %89 = arith.addf %88, %6 : vector<1x384xf32>
    %90 = arith.addf %86, %89 : vector<1x384xf32>
    %91 = vector.extract_strided_slice %90 {offsets = [0, 0], sizes = [1, 256], strides = [1, 1]} : vector<1x384xf32> to vector<1x256xf32>
    %92 = arith.negf %91 : vector<1x256xf32>
    %93 = math.exp %92 : vector<1x256xf32>
    %cst_21 = arith.constant 1.000000e+00 : f32
    %94 = vector.broadcast %cst_21 : f32 to vector<1x256xf32>
    %95 = arith.addf %94, %93 : vector<1x256xf32>
    %96 = arith.divf %94, %95 : vector<1x256xf32>
    %97 = vector.extract_strided_slice %96 {offsets = [0, 0], sizes = [1, 128], strides = [1, 1]} : vector<1x256xf32> to vector<1x128xf32>
    %98 = vector.extract_strided_slice %96 {offsets = [0, 128], sizes = [1, 128], strides = [1, 1]} : vector<1x256xf32> to vector<1x128xf32>
    %99 = vector.extract_strided_slice %86 {offsets = [0, 256], sizes = [1, 128], strides = [1, 1]} : vector<1x384xf32> to vector<1x128xf32>
    %100 = vector.extract_strided_slice %89 {offsets = [0, 256], sizes = [1, 128], strides = [1, 1]} : vector<1x384xf32> to vector<1x128xf32>
    %101 = arith.mulf %97, %100 : vector<1x128xf32>
    %102 = arith.addf %99, %101 : vector<1x128xf32>
    %103 = math.tanh %102 : vector<1x128xf32>
    %cst_22 = arith.constant 1.000000e+00 : f32
    %104 = vector.broadcast %cst_22 : f32 to vector<1x128xf32>
    %105 = arith.subf %104, %98 : vector<1x128xf32>
    %106 = arith.mulf %105, %103 : vector<1x128xf32>
    %107 = arith.mulf %98, %85 : vector<1x128xf32>
    %108 = arith.addf %106, %107 : vector<1x128xf32>
    %109 = vector.extract_strided_slice %16 {offsets = [4, 0], sizes = [1, 384], strides = [1, 1]} : vector<8x384xf32> to vector<1x384xf32>
    %110 = vector.extract_strided_slice %108 {offsets = [0, 0], sizes = [1, 24], strides = [1, 1]} : vector<1x128xf32> to vector<1x24xf32>
    %cst_23 = arith.constant dense<0.000000e+00> : vector<1x384xf32>
    %111 = tpu.matmul %110, %5, %cst_23 {dimension_numbers = #tpu.dot_dimension_numbers<[1], [0], [0], [1], [0, 0, 1, 1], [], []>} : vector<1x24xf32>, vector<24x384xf32>, vector<1x384xf32> -> vector<1x384xf32>
    %112 = arith.addf %111, %6 : vector<1x384xf32>
    %113 = arith.addf %109, %112 : vector<1x384xf32>
    %114 = vector.extract_strided_slice %113 {offsets = [0, 0], sizes = [1, 256], strides = [1, 1]} : vector<1x384xf32> to vector<1x256xf32>
    %115 = arith.negf %114 : vector<1x256xf32>
    %116 = math.exp %115 : vector<1x256xf32>
    %cst_24 = arith.constant 1.000000e+00 : f32
    %117 = vector.broadcast %cst_24 : f32 to vector<1x256xf32>
    %118 = arith.addf %117, %116 : vector<1x256xf32>
    %119 = arith.divf %117, %118 : vector<1x256xf32>
    %120 = vector.extract_strided_slice %119 {offsets = [0, 0], sizes = [1, 128], strides = [1, 1]} : vector<1x256xf32> to vector<1x128xf32>
    %121 = vector.extract_strided_slice %119 {offsets = [0, 128], sizes = [1, 128], strides = [1, 1]} : vector<1x256xf32> to vector<1x128xf32>
    %122 = vector.extract_strided_slice %109 {offsets = [0, 256], sizes = [1, 128], strides = [1, 1]} : vector<1x384xf32> to vector<1x128xf32>
    %123 = vector.extract_strided_slice %112 {offsets = [0, 256], sizes = [1, 128], strides = [1, 1]} : vector<1x384xf32> to vector<1x128xf32>
    %124 = arith.mulf %120, %123 : vector<1x128xf32>
    %125 = arith.addf %122, %124 : vector<1x128xf32>
    %126 = math.tanh %125 : vector<1x128xf32>
    %cst_25 = arith.constant 1.000000e+00 : f32
    %127 = vector.broadcast %cst_25 : f32 to vector<1x128xf32>
    %128 = arith.subf %127, %121 : vector<1x128xf32>
    %129 = arith.mulf %128, %126 : vector<1x128xf32>
    %130 = arith.mulf %121, %108 : vector<1x128xf32>
    %131 = arith.addf %129, %130 : vector<1x128xf32>
    %132 = vector.extract_strided_slice %16 {offsets = [5, 0], sizes = [1, 384], strides = [1, 1]} : vector<8x384xf32> to vector<1x384xf32>
    %133 = vector.extract_strided_slice %131 {offsets = [0, 0], sizes = [1, 24], strides = [1, 1]} : vector<1x128xf32> to vector<1x24xf32>
    %cst_26 = arith.constant dense<0.000000e+00> : vector<1x384xf32>
    %134 = tpu.matmul %133, %5, %cst_26 {dimension_numbers = #tpu.dot_dimension_numbers<[1], [0], [0], [1], [0, 0, 1, 1], [], []>} : vector<1x24xf32>, vector<24x384xf32>, vector<1x384xf32> -> vector<1x384xf32>
    %135 = arith.addf %134, %6 : vector<1x384xf32>
    %136 = arith.addf %132, %135 : vector<1x384xf32>
    %137 = vector.extract_strided_slice %136 {offsets = [0, 0], sizes = [1, 256], strides = [1, 1]} : vector<1x384xf32> to vector<1x256xf32>
    %138 = arith.negf %137 : vector<1x256xf32>
    %139 = math.exp %138 : vector<1x256xf32>
    %cst_27 = arith.constant 1.000000e+00 : f32
    %140 = vector.broadcast %cst_27 : f32 to vector<1x256xf32>
    %141 = arith.addf %140, %139 : vector<1x256xf32>
    %142 = arith.divf %140, %141 : vector<1x256xf32>
    %143 = vector.extract_strided_slice %142 {offsets = [0, 0], sizes = [1, 128], strides = [1, 1]} : vector<1x256xf32> to vector<1x128xf32>
    %144 = vector.extract_strided_slice %142 {offsets = [0, 128], sizes = [1, 128], strides = [1, 1]} : vector<1x256xf32> to vector<1x128xf32>
    %145 = vector.extract_strided_slice %132 {offsets = [0, 256], sizes = [1, 128], strides = [1, 1]} : vector<1x384xf32> to vector<1x128xf32>
    %146 = vector.extract_strided_slice %135 {offsets = [0, 256], sizes = [1, 128], strides = [1, 1]} : vector<1x384xf32> to vector<1x128xf32>
    %147 = arith.mulf %143, %146 : vector<1x128xf32>
    %148 = arith.addf %145, %147 : vector<1x128xf32>
    %149 = math.tanh %148 : vector<1x128xf32>
    %cst_28 = arith.constant 1.000000e+00 : f32
    %150 = vector.broadcast %cst_28 : f32 to vector<1x128xf32>
    %151 = arith.subf %150, %144 : vector<1x128xf32>
    %152 = arith.mulf %151, %149 : vector<1x128xf32>
    %153 = arith.mulf %144, %131 : vector<1x128xf32>
    %154 = arith.addf %152, %153 : vector<1x128xf32>
    %155 = vector.extract_strided_slice %16 {offsets = [6, 0], sizes = [1, 384], strides = [1, 1]} : vector<8x384xf32> to vector<1x384xf32>
    %156 = vector.extract_strided_slice %154 {offsets = [0, 0], sizes = [1, 24], strides = [1, 1]} : vector<1x128xf32> to vector<1x24xf32>
    %cst_29 = arith.constant dense<0.000000e+00> : vector<1x384xf32>
    %157 = tpu.matmul %156, %5, %cst_29 {dimension_numbers = #tpu.dot_dimension_numbers<[1], [0], [0], [1], [0, 0, 1, 1], [], []>} : vector<1x24xf32>, vector<24x384xf32>, vector<1x384xf32> -> vector<1x384xf32>
    %158 = arith.addf %157, %6 : vector<1x384xf32>
    %159 = arith.addf %155, %158 : vector<1x384xf32>
    %160 = vector.extract_strided_slice %159 {offsets = [0, 0], sizes = [1, 256], strides = [1, 1]} : vector<1x384xf32> to vector<1x256xf32>
    %161 = arith.negf %160 : vector<1x256xf32>
    %162 = math.exp %161 : vector<1x256xf32>
    %cst_30 = arith.constant 1.000000e+00 : f32
    %163 = vector.broadcast %cst_30 : f32 to vector<1x256xf32>
    %164 = arith.addf %163, %162 : vector<1x256xf32>
    %165 = arith.divf %163, %164 : vector<1x256xf32>
    %166 = vector.extract_strided_slice %165 {offsets = [0, 0], sizes = [1, 128], strides = [1, 1]} : vector<1x256xf32> to vector<1x128xf32>
    %167 = vector.extract_strided_slice %165 {offsets = [0, 128], sizes = [1, 128], strides = [1, 1]} : vector<1x256xf32> to vector<1x128xf32>
    %168 = vector.extract_strided_slice %155 {offsets = [0, 256], sizes = [1, 128], strides = [1, 1]} : vector<1x384xf32> to vector<1x128xf32>
    %169 = vector.extract_strided_slice %158 {offsets = [0, 256], sizes = [1, 128], strides = [1, 1]} : vector<1x384xf32> to vector<1x128xf32>
    %170 = arith.mulf %166, %169 : vector<1x128xf32>
    %171 = arith.addf %168, %170 : vector<1x128xf32>
    %172 = math.tanh %171 : vector<1x128xf32>
    %cst_31 = arith.constant 1.000000e+00 : f32
    %173 = vector.broadcast %cst_31 : f32 to vector<1x128xf32>
    %174 = arith.subf %173, %167 : vector<1x128xf32>
    %175 = arith.mulf %174, %172 : vector<1x128xf32>
    %176 = arith.mulf %167, %154 : vector<1x128xf32>
    %177 = arith.addf %175, %176 : vector<1x128xf32>
    %178 = vector.extract_strided_slice %16 {offsets = [7, 0], sizes = [1, 384], strides = [1, 1]} : vector<8x384xf32> to vector<1x384xf32>
    %179 = vector.extract_strided_slice %177 {offsets = [0, 0], sizes = [1, 24], strides = [1, 1]} : vector<1x128xf32> to vector<1x24xf32>
    %cst_32 = arith.constant dense<0.000000e+00> : vector<1x384xf32>
    %180 = tpu.matmul %179, %5, %cst_32 {dimension_numbers = #tpu.dot_dimension_numbers<[1], [0], [0], [1], [0, 0, 1, 1], [], []>} : vector<1x24xf32>, vector<24x384xf32>, vector<1x384xf32> -> vector<1x384xf32>
    %181 = arith.addf %180, %6 : vector<1x384xf32>
    %182 = arith.addf %178, %181 : vector<1x384xf32>
    %183 = vector.extract_strided_slice %182 {offsets = [0, 0], sizes = [1, 256], strides = [1, 1]} : vector<1x384xf32> to vector<1x256xf32>
    %184 = arith.negf %183 : vector<1x256xf32>
    %185 = math.exp %184 : vector<1x256xf32>
    %cst_33 = arith.constant 1.000000e+00 : f32
    %186 = vector.broadcast %cst_33 : f32 to vector<1x256xf32>
    %187 = arith.addf %186, %185 : vector<1x256xf32>
    %188 = arith.divf %186, %187 : vector<1x256xf32>
    %189 = vector.extract_strided_slice %188 {offsets = [0, 0], sizes = [1, 128], strides = [1, 1]} : vector<1x256xf32> to vector<1x128xf32>
    %190 = vector.extract_strided_slice %188 {offsets = [0, 128], sizes = [1, 128], strides = [1, 1]} : vector<1x256xf32> to vector<1x128xf32>
    %191 = vector.extract_strided_slice %178 {offsets = [0, 256], sizes = [1, 128], strides = [1, 1]} : vector<1x384xf32> to vector<1x128xf32>
    %192 = vector.extract_strided_slice %181 {offsets = [0, 256], sizes = [1, 128], strides = [1, 1]} : vector<1x384xf32> to vector<1x128xf32>
    %193 = arith.mulf %189, %192 : vector<1x128xf32>
    %194 = arith.addf %191, %193 : vector<1x128xf32>
    %195 = math.tanh %194 : vector<1x128xf32>
    %cst_34 = arith.constant 1.000000e+00 : f32
    %196 = vector.broadcast %cst_34 : f32 to vector<1x128xf32>
    %197 = arith.subf %196, %190 : vector<1x128xf32>
    %198 = arith.mulf %197, %195 : vector<1x128xf32>
    %199 = arith.mulf %190, %177 : vector<1x128xf32>
    %200 = arith.addf %198, %199 : vector<1x128xf32>
    %201 = tpu.concatenate %39, %62, %85, %108, %131, %154, %177, %200 in 0 : vector<1x128xf32>, vector<1x128xf32>, vector<1x128xf32>, vector<1x128xf32>, vector<1x128xf32>, vector<1x128xf32>, vector<1x128xf32>, vector<1x128xf32> -> vector<8x128xf32>
    %202 = arith.index_cast %9 : i32 to index
    %c0_35 = arith.constant 0 : index
    %203 = vector.load %arg8[%202, %c0_35] : memref<8x128xf32, #tpu.memory_space<vmem>>, vector<8x128xf32>
    tpu.vector_store %arg8[%202, %c0_35], %201 {strides = array<i32>} : memref<8x128xf32, #tpu.memory_space<vmem>>, vector<8x128xf32>,
    %c1_i32 = arith.constant 1 : i32
    %c0_36 = arith.constant 0 : index
    %c0_37 = arith.constant 0 : index
    %204 = vector.load %arg9[%c0_36, %c0_37] : memref<1x128xf32, #tpu.memory_space<vmem>>, vector<1x128xf32>
    tpu.vector_store %arg9[%c0_36, %c0_37], %200 {strides = array<i32>} : memref<1x128xf32, #tpu.memory_space<vmem>>, vector<1x128xf32>,
    %c0_38 = arith.constant 0 : index
    %c0_39 = arith.constant 0 : index
    %205 = vector.load %arg8[%c0_38, %c0_39] : memref<8x128xf32, #tpu.memory_space<vmem>>, vector<8x128xf32>
    %c0_40 = arith.constant 0 : index
    %c0_41 = arith.constant 0 : index
    %206 = vector.load %arg6[%c0_40, %c0_41] : memref<128x128xf32, #tpu.memory_space<vmem>>, vector<128x128xf32>
    %cst_42 = arith.constant dense<0.000000e+00> : vector<8x128xf32>
    %207 = tpu.matmul %205, %206, %cst_42 {dimension_numbers = #tpu.dot_dimension_numbers<[1], [0], [0], [1], [0, 0, 1, 1], [], []>} : vector<8x128xf32>, vector<128x128xf32>, vector<8x128xf32> -> vector<8x128xf32>
    %c0_43 = arith.constant 0 : index
    %c0_44 = arith.constant 0 : index
    %208 = vector.load %arg7[%c0_43, %c0_44] : memref<1x128xf32, #tpu.memory_space<vmem>>, vector<1x128xf32>
    %209 = vector.broadcast %208 : vector<1x128xf32> to vector<8x128xf32>
    %210 = arith.addf %207, %209 : vector<8x128xf32>
    %c0_45 = arith.constant 0 : index
    %c0_46 = arith.constant 0 : index
    %211 = vector.load %arg8[%c0_45, %c0_46] : memref<8x128xf32, #tpu.memory_space<vmem>>, vector<8x128xf32>
    tpu.vector_store %arg8[%c0_45, %c0_46], %210 {strides = array<i32>} : memref<8x128xf32, #tpu.memory_space<vmem>>, vector<8x128xf32>,
    return
  }
  func.func @transform_0(%arg0: i32) -> (i32, i32) {
    %c0_i32 = arith.constant 0 : i32
    %c0_i32_0 = arith.constant 0 : i32
    return %arg0, %c0_i32 : i32, i32
  }
  func.func @transform_1(%arg0: i32) -> (i32, i32) {
    %c0_i32 = arith.constant 0 : i32
    %c0_i32_0 = arith.constant 0 : i32
    %c0_i32_1 = arith.constant 0 : i32
    return %c0_i32, %c0_i32_0 : i32, i32
  }
  func.func @transform_2(%arg0: i32) -> (i32, i32) {
    %c0_i32 = arith.constant 0 : i32
    %c0_i32_0 = arith.constant 0 : i32
    %c0_i32_1 = arith.constant 0 : i32
    return %c0_i32, %c0_i32_0 : i32, i32
  }
  func.func @transform_3(%arg0: i32) -> (i32, i32) {
    %c0_i32 = arith.constant 0 : i32
    %c0_i32_0 = arith.constant 0 : i32
    %c0_i32_1 = arith.constant 0 : i32
    return %c0_i32, %c0_i32_0 : i32, i32
  }
  func.func @transform_4(%arg0: i32) -> (i32, i32) {
    %c0_i32 = arith.constant 0 : i32
    %c0_i32_0 = arith.constant 0 : i32
    %c0_i32_1 = arith.constant 0 : i32
    return %c0_i32, %c0_i32_0 : i32, i32
  }
  func.func @transform_5(%arg0: i32) -> (i32, i32) {
    %c0_i32 = arith.constant 0 : i32
    %c0_i32_0 = arith.constant 0 : i32
    %c0_i32_1 = arith.constant 0 : i32
    return %c0_i32, %c0_i32_0 : i32, i32
  }
  func.func @transform_6(%arg0: i32) -> (i32, i32) {
    %c0_i32 = arith.constant 0 : i32
    %c0_i32_0 = arith.constant 0 : i32
    %c0_i32_1 = arith.constant 0 : i32
    return %c0_i32, %c0_i32_0 : i32, i32
  }
  func.func @transform_7(%arg0: i32) -> (i32, i32) {
    %c0_i32 = arith.constant 0 : i32
    %c0_i32_0 = arith.constant 0 : i32
    return %arg0, %c0_i32 : i32, i32
  }
}

</mosaic_0001>

<llo_original>
// kernel: tpu_custom_call.1
$region0: #{tpu_custom_call.1}
  #allocation0 [shape = 'u32[]', space=smem, size = 0x4, offset = 0x4, fixed_abs, tag = 'smem constant byte address 0x4 - core index']
  #allocation1 [shape = 'u32[144,128]{1,0:T(1,128)}', space=vmem, size = 0x12000, scoped, tag = 'internal scratch']
  #allocation2 [shape = 'f32[1,128]{1,0:T(1,128)}', space=vmem, size = 0x200, scoped, tag = 'scratch operand']
  %s0 = inlined_call_operand.vmem [shape: f32[8,1], index: 0, kind: input, shape index: {}]
  %s1 = inlined_call_operand.vmem [shape: f32[1,384], index: 1, kind: input, shape index: {}]
  %s2 = inlined_call_operand.vmem [shape: f32[1,384], index: 2, kind: input, shape index: {}]
  %s3 = inlined_call_operand.hbm [shape: f32[24,384], index: 3, kind: input, shape index: {}]
  %s4 = inlined_call_operand.vmem [shape: f32[1,384], index: 4, kind: input, shape index: {}]
  %s5 = inlined_call_operand.hbm [shape: f32[128,128], index: 5, kind: input, shape index: {}]
  %s6 = inlined_call_operand.vmem [shape: f32[1,128], index: 6, kind: input, shape index: {}]
  %s7 = inlined_call_operand.hbm [shape: f32[8,128], index: 7, kind: output, shape index: {}]
  %s8 = sld [smem:[#allocation0]]
  $region50: #{tpu_custom_call.1} parent=0
    _
  %s10 = ssub.s32 1, %s8
  %s11 = scalar_select 0, %s10, %s8
  $region1: #{tpu_custom_call.1} parent=0
    #allocation3 [shape = 'u8[36864]{0}', space=vmem, size = 0x9000, scoped, tag = 'input window, operand 3, single buffered']
    #allocation4 [shape = 's32[1]{0}', space=sflag, size = 0x4, scoped, tag = 'scoped memory for tpu_custom_call.1']
    #allocation5 [shape = 's32[1]{0}', space=sflag, size = 0x4, scoped, tag = 'scoped memory for tpu_custom_call.1']
    #allocation6 [shape = 'u8[65536]{0}', space=vmem, size = 0x10000, scoped, tag = 'input window, operand 5, single buffered']
    #allocation7 [shape = 's32[1]{0}', space=sflag, size = 0x4, scoped, tag = 'scoped memory for tpu_custom_call.1']
    #allocation8 [shape = 'u8[4096]{0}', space=vmem, size = 0x1000, scoped, tag = 'output window, operand 0, single buffered']
    %12 = vsyncpa [#allocation4], 0
    %13 = vsyncpa [#allocation7], 0
    %14 = vsyncpa [#allocation5], 0
    // Predicated region
    $region2: #{tpu_custom_call.1} parent=1 // pred_check
      _
    $region3: #{tpu_custom_call.1} parent=1 // pred_check_branch
      %16 = sbr.rel (0) target = $region5
    $region4: #{tpu_custom_call.1} parent=1 // pred_region
      _
    $region5: #{tpu_custom_call.1} parent=1 // pred_fallthru
      _
    // Predicated region
    $region6: #{tpu_custom_call.1} parent=1 // pred_check
      _
    $region7: #{tpu_custom_call.1} parent=1 // pred_check_branch
      %18 = sbr.rel (0) target = $region9
    $region8: #{tpu_custom_call.1} parent=1 // pred_region
      _
    $region9: #{tpu_custom_call.1} parent=1 // pred_fallthru
      _
    // Predicated region
    $region10: #{tpu_custom_call.1} parent=1 // pred_check
      _
    $region11: #{tpu_custom_call.1} parent=1 // pred_check_branch
      %20 = sbr.rel (0) target = $region13
    $region12: #{tpu_custom_call.1} parent=1 // pred_region
      _
    $region13: #{tpu_custom_call.1} parent=1 // pred_fallthru
      _
    // Predicated region
    $region14: #{tpu_custom_call.1} parent=1 // pred_check
      _
    $region15: #{tpu_custom_call.1} parent=1 // pred_check_branch
      %22 = sbr.rel (0) target = $region17
    $region16: #{tpu_custom_call.1} parent=1 // pred_region
      %s24 = ssub.s32 1152, 1152
      %25 = vsyncadd [#allocation4], %s24
      %s26 = sshll.u32 [#allocation3], 4
      %s27 = int_to_ptr.vmem [resolvable:$true] %s26
      %32 = dma.hbm_to_vmem [thread:$0]  %s3, 1152, %s27, [#allocation4], 384, 384, 24
    $region17: #{tpu_custom_call.1} parent=1 // pred_fallthru
      _
    // Predicated region
    $region18: #{tpu_custom_call.1} parent=1 // pred_check
      _
    $region19: #{tpu_custom_call.1} parent=1 // pred_check_branch
      %34 = sbr.rel (0) target = $region21
    $region20: #{tpu_custom_call.1} parent=1 // pred_region
      _
    $region21: #{tpu_custom_call.1} parent=1 // pred_fallthru
      _
    // Predicated region
    $region22: #{tpu_custom_call.1} parent=1 // pred_check
      _
    $region23: #{tpu_custom_call.1} parent=1 // pred_check_branch
      %36 = sbr.rel (0) target = $region25
    $region24: #{tpu_custom_call.1} parent=1 // pred_region
      %s38 = ssub.s32 2048, 2048
      %39 = vsyncadd [#allocation7], %s38
      %s40 = sshll.u32 [#allocation6], 4
      %s41 = int_to_ptr.vmem [resolvable:$true] %s40
      %46 = dma.hbm_to_vmem [thread:$0]  %s5, 2048, %s41, [#allocation7], 128, 128, 8
    $region25: #{tpu_custom_call.1} parent=1 // pred_fallthru
      _
    // Predicated region
    $region26: #{tpu_custom_call.1} parent=1 // pred_check
      _
    $region27: #{tpu_custom_call.1} parent=1 // pred_check_branch
      %48 = sbr.rel (0) target = $region29
    $region28: #{tpu_custom_call.1} parent=1 // pred_region
      _
    $region29: #{tpu_custom_call.1} parent=1 // pred_fallthru
      _
    // Predicated region
    $region30: #{tpu_custom_call.1} parent=1 // pred_check
      _
    $region31: #{tpu_custom_call.1} parent=1 // pred_check_branch
      %50 = sbr.rel (0) target = $region33
    $region32: #{tpu_custom_call.1} parent=1 // pred_region
      %51 = dma.done [#allocation4], 1152
    $region33: #{tpu_custom_call.1} parent=1 // pred_fallthru
      _
    // Predicated region
    $region34: #{tpu_custom_call.1} parent=1 // pred_check
      _
    $region35: #{tpu_custom_call.1} parent=1 // pred_check_branch
      %53 = sbr.rel (0) target = $region37
    $region36: #{tpu_custom_call.1} parent=1 // pred_region
      %54 = dma.done [#allocation7], 2048
    $region37: #{tpu_custom_call.1} parent=1 // pred_fallthru
      _
    %p55 = scmp.eq.s32.totalorder 0, 0
    // Predicated region
    $region38: #{tpu_custom_call.1} parent=1 // pred_check
      %p56 = pneg %p55
    $region39: #{tpu_custom_call.1} parent=1 // pred_check_branch
      %58 = sbr.rel (%p56) target = $region41
    $region40: #{tpu_custom_call.1} parent=1 // pred_region
      %59 = vst [vmem:[#allocation2] sm:$0x1] 0.0
    $region41: #{tpu_custom_call.1} parent=1 // pred_fallthru
      _
    %v60 = vld [vmem:[%s1] sm:$0x7]
    %v61 = vld [vmem:[%s2] sm:$0x7]
    %v62 = vld [vmem:[#allocation3] sm:$0xff]
    %v63 = vld [vmem:[#allocation3 + $0x8] sm:$0xff]
    %v64 = vld [vmem:[#allocation3 + $0x10] sm:$0xff]
    %v65 = vld [vmem:[#allocation3 + $0x18] sm:$0xff]
    %v66 = vld [vmem:[#allocation3 + $0x20] sm:$0xff]
    %v67 = vld [vmem:[#allocation3 + $0x28] sm:$0xff]
    %v68 = vld [vmem:[#allocation3 + $0x30] sm:$0xff]
    %v69 = vld [vmem:[#allocation3 + $0x38] sm:$0xff]
    %v70 = vld [vmem:[#allocation3 + $0x40] sm:$0xff]
    %v71 = vld [vmem:[%s4] sm:$0x7]
    %v72 = vld [vmem:[#allocation2] sm:$0x1]
    %v73 = vld [vmem:[%s0] sm:$0xff]
    %75 = vset.pattern.permute.xlu0 0
    %76 = vperm.xlu0 %75, %v73
    %v77 = vpop.permute.xlu0 %76
    %v80 = vlaneseq
    %v81 = vshrl.u32 %v80, 7
    %v82 = vsub.s32 0, %v81
    %v83 = vrot.slane %v60, %v82
    %v84 = vlaneseq
    %v85 = vshrl.u32 %v84, 7
    %v86 = vsub.s32 1, %v85
    %v87 = vrot.slane %v60, %v86
    %v88 = vlaneseq
    %v89 = vshrl.u32 %v88, 7
    %v90 = vsub.s32 2, %v89
    %v91 = vrot.slane %v60, %v90
    %v95 = vmul.f32 %v77, %v83
    %v96 = vmul.f32 %v77, %v87
    %v97 = vmul.f32 %v77, %v91
    %v99 = vlaneseq
    %v100 = vshrl.u32 %v99, 7
    %v101 = vsub.s32 0, %v100
    %v102 = vrot.slane %v61, %v101
    %v103 = vlaneseq
    %v104 = vshrl.u32 %v103, 7
    %v105 = vsub.s32 1, %v104
    %v106 = vrot.slane %v61, %v105
    %v107 = vlaneseq
    %v108 = vshrl.u32 %v107, 7
    %v109 = vsub.s32 2, %v108
    %v110 = vrot.slane %v61, %v109
    %v114 = vadd.f32 %v95, %v102
    %v115 = vadd.f32 %v96, %v106
    %v116 = vadd.f32 %v97, %v110
    %v118 = vlaneseq
    %v119 = vshrl.u32 %v118, 7
    %v120 = vsub.s32 0, %v119
    %v121 = vrot.slane %v71, %v120
    %v122 = vlaneseq
    %v123 = vshrl.u32 %v122, 7
    %v124 = vsub.s32 1, %v123
    %v125 = vrot.slane %v71, %v124
    %v126 = vlaneseq
    %v127 = vshrl.u32 %v126, 7
    %v128 = vsub.s32 2, %v127
    %v129 = vrot.slane %v71, %v128
    %vm133 = vcmask 195584
    %v135 = vsel %vm133, %v72, 0
    %137 = vmatprep.subr.mxu0 %v63
    %138 = vmatpush1.msra.mxu0 %v62
    %139 = vmatprep.subr.mxu0 %v66
    %140 = vmatpush1.msra.mxu0 %v65
    %141 = vmatprep.subr.mxu0 %v69
    %142 = vmatpush1.msra.mxu0 %v68
    %143 = vmatprep.subr.mxu0 0.0
    %144 = vmatpush1.msra.mxu0 0.0
    %145 = vmatprep.subr.mxu0 0.0
    %146 = vmatpush1.msra.mxu0 0.0
    %147 = vmatprep.subr.mxu0 0.0
    %148 = vmatpush1.msra.mxu0 0.0
    %149 = vmatprep.subr.mxu0 0.0
    %150 = vmatpush1.msra.mxu0 0.0
    %151 = vmatprep.subr.mxu0 0.0
    %152 = vmatpush1.msra.mxu0 0.0
    %153 = vmatprep.subr.mxu0 0.0
    %154 = vmatpush1.msra.mxu0 0.0
    %155 = vmatprep.subr.mxu0 0.0
    %156 = vmatpush1.msra.mxu0 0.0
    %157 = vmatprep.subr.mxu0 0.0
    %158 = vmatpush1.msra.mxu0 0.0
    %159 = vmatprep.subr.mxu0 0.0
    %160 = vmatpush1.msra.mxu0 0.0
    %161 = vmatprep.subr.mxu0 0.0
    %162 = vmatpush1.msra.mxu0 0.0
    %163 = vmatprep.subr.mxu0 0.0
    %164 = vmatpush1.msra.mxu0 0.0
    %165 = vmatprep.subr.mxu0 0.0
    %166 = vmatpush1.msra.mxu0 0.0
    %167 = vmatprep.subr.mxu0 0.0
    %168 = vmatpush1.msra.mxu0 0.0
    %169 = vmatprep.subr.mxu0 0.0
    %170 = vmatpush1.msra.mxu0 0.0
    %171 = vmatprep.subr.mxu0 0.0
    %172 = vmatpush1.msra.mxu0 0.0
    %173 = vmatprep.subr.mxu0 0.0
    %174 = vmatpush1.msra.mxu0 0.0
    %175 = vmatprep.subr.mxu0 0.0
    %176 = vmatpush1.msra.mxu0 0.0
    %177 = vmatprep.subr.mxu0 0.0
    %178 = vmatpush1.msra.mxu0 0.0
    %179 = vmatprep.subr.mxu0 0.0
    %180 = vmatpush1.msra.mxu0 0.0
    %181 = vmatprep.subr.mxu0 0.0
    %182 = vmatpush1.msra.mxu0 0.0
    %183 = vmatprep.subr.mxu0 0.0
    %184 = vmatpush1.msra.mxu0 0.0
    %185 = vmatprep.subr.mxu0 0.0
    %186 = vmatpush1.msra.mxu0 0.0
    %187 = vmatprep.subr.mxu0 0.0
    %188 = vmatpush1.msra.mxu0 0.0
    %189 = vmatprep.subr.mxu0 0.0
    %190 = vmatpush1.msra.mxu0 0.0
    %191 = vmatprep.subr.mxu0 0.0
    %192 = vmatpush1.msra.mxu0 0.0
    %193 = vmatprep.subr.mxu0 0.0
    %194 = vmatpush1.msra.mxu0 0.0
    %195 = vmatprep.subr.mxu0 0.0
    %196 = vmatpush1.msra.mxu0 0.0
    %197 = vmatprep.subr.mxu0 0.0
    %198 = vmatpush1.msra.mxu0 0.0
    %199 = vmatprep.subr.mxu0 0.0
    %200 = vmatpush1.msra.mxu0 0.0
    %201 = vmatprep.mubr.f32.mxu0 0.0
    %202 = vmatmul.mubr.f32.gmra.mrb[0].mxu0 %v135
    %v203 = vpop.f32.mrb[0].mxu0
    %v204 = vadd.f32 %v121, %v203
    %v205 = vpop.f32.mrb[0].mxu0
    %v206 = vadd.f32 %v125, %v205
    %207 = vdwg.mxu0
    %208 = vmatprep.subr.mxu0 0.0
    %209 = vmatpush1.msra.mxu0 %v64
    %210 = vmatprep.subr.mxu0 0.0
    %211 = vmatpush1.msra.mxu0 %v67
    %212 = vmatprep.subr.mxu0 0.0
    %213 = vmatpush1.msra.mxu0 %v70
    %214 = vmatprep.subr.mxu0 0.0
    %215 = vmatpush1.msra.mxu0 0.0
    %216 = vmatprep.subr.mxu0 0.0
    %217 = vmatpush1.msra.mxu0 0.0
    %218 = vmatprep.subr.mxu0 0.0
    %219 = vmatpush1.msra.mxu0 0.0
    %220 = vmatprep.subr.mxu0 0.0
    %221 = vmatpush1.msra.mxu0 0.0
    %222 = vmatprep.subr.mxu0 0.0
    %223 = vmatpush1.msra.mxu0 0.0
    %224 = vmatprep.subr.mxu0 0.0
    %225 = vmatpush1.msra.mxu0 0.0
    %226 = vmatprep.subr.mxu0 0.0
    %227 = vmatpush1.msra.mxu0 0.0
    %228 = vmatprep.subr.mxu0 0.0
    %229 = vmatpush1.msra.mxu0 0.0
    %230 = vmatprep.subr.mxu0 0.0
    %231 = vmatpush1.msra.mxu0 0.0
    %232 = vmatprep.subr.mxu0 0.0
    %233 = vmatpush1.msra.mxu0 0.0
    %234 = vmatprep.subr.mxu0 0.0
    %235 = vmatpush1.msra.mxu0 0.0
    %236 = vmatprep.subr.mxu0 0.0
    %237 = vmatpush1.msra.mxu0 0.0
    %238 = vmatprep.subr.mxu0 0.0
    %239 = vmatpush1.msra.mxu0 0.0
    %240 = vmatprep.subr.mxu0 0.0
    %241 = vmatpush1.msra.mxu0 0.0
    %242 = vmatprep.subr.mxu0 0.0
    %243 = vmatpush1.msra.mxu0 0.0
    %244 = vmatprep.subr.mxu0 0.0
    %245 = vmatpush1.msra.mxu0 0.0
    %246 = vmatprep.subr.mxu0 0.0
    %247 = vmatpush1.msra.mxu0 0.0
    %248 = vmatprep.subr.mxu0 0.0
    %249 = vmatpush1.msra.mxu0 0.0
    %250 = vmatprep.subr.mxu0 0.0
    %251 = vmatpush1.msra.mxu0 0.0
    %252 = vmatprep.subr.mxu0 0.0
    %253 = vmatpush1.msra.mxu0 0.0
    %254 = vmatprep.subr.mxu0 0.0
    %255 = vmatpush1.msra.mxu0 0.0
    %256 = vmatprep.subr.mxu0 0.0
    %257 = vmatpush1.msra.mxu0 0.0
    %258 = vmatprep.subr.mxu0 0.0
    %259 = vmatpush1.msra.mxu0 0.0
    %260 = vmatprep.subr.mxu0 0.0
    %261 = vmatpush1.msra.mxu0 0.0
    %262 = vmatprep.subr.mxu0 0.0
    %263 = vmatpush1.msra.mxu0 0.0
    %264 = vmatprep.subr.mxu0 0.0
    %265 = vmatpush1.msra.mxu0 0.0
    %266 = vmatprep.subr.mxu0 0.0
    %267 = vmatpush1.msra.mxu0 0.0
    %268 = vmatprep.subr.mxu0 0.0
    %269 = vmatpush1.msra.mxu0 0.0
    %270 = vmatprep.subr.mxu0 0.0
    %271 = vmatpush1.msra.mxu0 0.0
    %272 = vmatprep.mubr.f32.mxu0 0.0
    %273 = vmatmul.mubr.f32.gmra.mrb[0].mxu0 %v135
    %v274 = vpop.f32.mrb[0].mxu0
    %v275 = vadd.f32 %v129, %v274
    %v276 = vpop.f32.mrb[0].mxu0
    %277 = vdwg.mxu0
    %v278 = vadd.f32 %v114, %v204
    %v279 = vadd.f32 %v115, %v206
    %v280 = vxor.u32 %v278, 2147483648
    %v281 = vxor.u32 %v279, 2147483648
    %v282 = vmul.f32 %v280, 1.442695
    %v283 = vpow.pop %v282
    %v284 = vmul.f32 %v281, 1.442695
    %v285 = vpow.pop %v284
    %v286 = vadd.f32 %v283, 1.0
    %v287 = vadd.f32 %v285, 1.0
    %v288 = vrcp.pop %v286
    %v289 = vmul.f32 1.0, %v288
    %v290 = vrcp.pop %v287
    %v291 = vmul.f32 1.0, %v290
    %v292 = vmul.f32 %v289, %v275
    %v293 = vadd.f32 %v116, %v292
    %v294 = vtanh.pop %v293
    %v295 = vsub.f32 1.0, %v291
    %v296 = vmul.f32 %v295, %v294
    %v297 = vmul.f32 %v291, %v72
    %v298 = vadd.f32 %v296, %v297
    %v300 = vsel %vm133, %v298, 0
    %302 = vmatprep.subr.mxu0 %v63
    %303 = vmatpush1.msra.mxu0 %v62
    %304 = vmatprep.subr.mxu0 %v66
    %305 = vmatpush1.msra.mxu0 %v65
    %306 = vmatprep.subr.mxu0 %v69
    %307 = vmatpush1.msra.mxu0 %v68
    %308 = vmatprep.subr.mxu0 0.0
    %309 = vmatpush1.msra.mxu0 0.0
    %310 = vmatprep.subr.mxu0 0.0
    %311 = vmatpush1.msra.mxu0 0.0
    %312 = vmatprep.subr.mxu0 0.0
    %313 = vmatpush1.msra.mxu0 0.0
    %314 = vmatprep.subr.mxu0 0.0
    %315 = vmatpush1.msra.mxu0 0.0
    %316 = vmatprep.subr.mxu0 0.0
    %317 = vmatpush1.msra.mxu0 0.0
    %318 = vmatprep.subr.mxu0 0.0
    %319 = vmatpush1.msra.mxu0 0.0
    %320 = vmatprep.subr.mxu0 0.0
    %321 = vmatpush1.msra.mxu0 0.0
    %322 = vmatprep.subr.mxu0 0.0
    %323 = vmatpush1.msra.mxu0 0.0
    %324 = vmatprep.subr.mxu0 0.0
    %325 = vmatpush1.msra.mxu0 0.0
    %326 = vmatprep.subr.mxu0 0.0
    %327 = vmatpush1.msra.mxu0 0.0
    %328 = vmatprep.subr.mxu0 0.0
    %329 = vmatpush1.msra.mxu0 0.0
    %330 = vmatprep.subr.mxu0 0.0
    %331 = vmatpush1.msra.mxu0 0.0
    %332 = vmatprep.subr.mxu0 0.0
    %333 = vmatpush1.msra.mxu0 0.0
    %334 = vmatprep.subr.mxu0 0.0
    %335 = vmatpush1.msra.mxu0 0.0
    %336 = vmatprep.subr.mxu0 0.0
    %337 = vmatpush1.msra.mxu0 0.0
    %338 = vmatprep.subr.mxu0 0.0
    %339 = vmatpush1.msra.mxu0 0.0
    %340 = vmatprep.subr.mxu0 0.0
    %341 = vmatpush1.msra.mxu0 0.0
    %342 = vmatprep.subr.mxu0 0.0
    %343 = vmatpush1.msra.mxu0 0.0
    %344 = vmatprep.subr.mxu0 0.0
    %345 = vmatpush1.msra.mxu0 0.0
    %346 = vmatprep.subr.mxu0 0.0
    %347 = vmatpush1.msra.mxu0 0.0
    %348 = vmatprep.subr.mxu0 0.0
    %349 = vmatpush1.msra.mxu0 0.0
    %350 = vmatprep.subr.mxu0 0.0
    %351 = vmatpush1.msra.mxu0 0.0
    %352 = vmatprep.subr.mxu0 0.0
    %353 = vmatpush1.msra.mxu0 0.0
    %354 = vmatprep.subr.mxu0 0.0
    %355 = vmatpush1.msra.mxu0 0.0
    %356 = vmatprep.subr.mxu0 0.0
    %357 = vmatpush1.msra.mxu0 0.0
    %358 = vmatprep.subr.mxu0 0.0
    %359 = vmatpush1.msra.mxu0 0.0
    %360 = vmatprep.subr.mxu0 0.0
    %361 = vmatpush1.msra.mxu0 0.0
    %362 = vmatprep.subr.mxu0 0.0
    %363 = vmatpush1.msra.mxu0 0.0
    %364 = vmatprep.subr.mxu0 0.0
    %365 = vmatpush1.msra.mxu0 0.0
    %366 = vmatprep.mubr.f32.mxu0 0.0
    %367 = vmatmul.mubr.f32.gmra.mrb[0].mxu0 %v300
    %v368 = vpop.f32.mrb[0].mxu0
    %v369 = vadd.f32 %v121, %v368
    %v370 = vpop.f32.mrb[0].mxu0
    %v371 = vadd.f32 %v125, %v370
    %372 = vdwg.mxu0
    %373 = vmatprep.subr.mxu0 0.0
    %374 = vmatpush1.msra.mxu0 %v64
    %375 = vmatprep.subr.mxu0 0.0
    %376 = vmatpush1.msra.mxu0 %v67
    %377 = vmatprep.subr.mxu0 0.0
    %378 = vmatpush1.msra.mxu0 %v70
    %379 = vmatprep.subr.mxu0 0.0
    %380 = vmatpush1.msra.mxu0 0.0
    %381 = vmatprep.subr.mxu0 0.0
    %382 = vmatpush1.msra.mxu0 0.0
    %383 = vmatprep.subr.mxu0 0.0
    %384 = vmatpush1.msra.mxu0 0.0
    %385 = vmatprep.subr.mxu0 0.0
    %386 = vmatpush1.msra.mxu0 0.0
    %387 = vmatprep.subr.mxu0 0.0
    %388 = vmatpush1.msra.mxu0 0.0
    %389 = vmatprep.subr.mxu0 0.0
    %390 = vmatpush1.msra.mxu0 0.0
    %391 = vmatprep.subr.mxu0 0.0
    %392 = vmatpush1.msra.mxu0 0.0
    %393 = vmatprep.subr.mxu0 0.0
    %394 = vmatpush1.msra.mxu0 0.0
    %395 = vmatprep.subr.mxu0 0.0
    %396 = vmatpush1.msra.mxu0 0.0
    %397 = vmatprep.subr.mxu0 0.0
    %398 = vmatpush1.msra.mxu0 0.0
    %399 = vmatprep.subr.mxu0 0.0
    %400 = vmatpush1.msra.mxu0 0.0
    %401 = vmatprep.subr.mxu0 0.0
    %402 = vmatpush1.msra.mxu0 0.0
    %403 = vmatprep.subr.mxu0 0.0
    %404 = vmatpush1.msra.mxu0 0.0
    %405 = vmatprep.subr.mxu0 0.0
    %406 = vmatpush1.msra.mxu0 0.0
    %407 = vmatprep.subr.mxu0 0.0
    %408 = vmatpush1.msra.mxu0 0.0
    %409 = vmatprep.subr.mxu0 0.0
    %410 = vmatpush1.msra.mxu0 0.0
    %411 = vmatprep.subr.mxu0 0.0
    %412 = vmatpush1.msra.mxu0 0.0
    %413 = vmatprep.subr.mxu0 0.0
    %414 = vmatpush1.msra.mxu0 0.0
    %415 = vmatprep.subr.mxu0 0.0
    %416 = vmatpush1.msra.mxu0 0.0
    %417 = vmatprep.subr.mxu0 0.0
    %418 = vmatpush1.msra.mxu0 0.0
    %419 = vmatprep.subr.mxu0 0.0
    %420 = vmatpush1.msra.mxu0 0.0
    %421 = vmatprep.subr.mxu0 0.0
    %422 = vmatpush1.msra.mxu0 0.0
    %423 = vmatprep.subr.mxu0 0.0
    %424 = vmatpush1.msra.mxu0 0.0
    %425 = vmatprep.subr.mxu0 0.0
    %426 = vmatpush1.msra.mxu0 0.0
    %427 = vmatprep.subr.mxu0 0.0
    %428 = vmatpush1.msra.mxu0 0.0
    %429 = vmatprep.subr.mxu0 0.0
    %430 = vmatpush1.msra.mxu0 0.0
    %431 = vmatprep.subr.mxu0 0.0
    %432 = vmatpush1.msra.mxu0 0.0
    %433 = vmatprep.subr.mxu0 0.0
    %434 = vmatpush1.msra.mxu0 0.0
    %435 = vmatprep.subr.mxu0 0.0
    %436 = vmatpush1.msra.mxu0 0.0
    %437 = vmatprep.mubr.f32.mxu0 0.0
    %438 = vmatmul.mubr.f32.gmra.mrb[0].mxu0 %v300
    %v439 = vpop.f32.mrb[0].mxu0
    %v440 = vadd.f32 %v129, %v439
    %v441 = vpop.f32.mrb[0].mxu0
    %442 = vdwg.mxu0
    %v445 = vrot.slane %v369, 7
    %v446 = vrot.slane %v371, 7
    %v449 = vadd.f32 %v114, %v445
    %v450 = vadd.f32 %v115, %v446
    %v451 = vxor.u32 %v449, 2147483648
    %v452 = vxor.u32 %v450, 2147483648
    %v453 = vmul.f32 %v451, 1.442695
    %v454 = vpow.pop %v453
    %v455 = vmul.f32 %v452, 1.442695
    %v456 = vpow.pop %v455
    %v457 = vadd.f32 %v454, 1.0
    %v458 = vadd.f32 %v456, 1.0
    %v459 = vrcp.pop %v457
    %v460 = vmul.f32 1.0, %v459
    %v461 = vrcp.pop %v458
    %v462 = vmul.f32 1.0, %v461
    %v464 = vrot.slane %v440, 7
    %v466 = vmul.f32 %v460, %v464
    %v467 = vadd.f32 %v116, %v466
    %v468 = vtanh.pop %v467
    %v469 = vsub.f32 1.0, %v462
    %v470 = vmul.f32 %v469, %v468
    %v471 = vrot.slane %v298, 7
    %v473 = vmul.f32 %v462, %v471
    %v474 = vadd.f32 %v470, %v473
    %v476 = vrot.slane %v474, 1
    %v477 = vsel %vm133, %v476, 0
    %479 = vmatprep.subr.mxu0 %v63
    %480 = vmatpush1.msra.mxu0 %v62
    %481 = vmatprep.subr.mxu0 %v66
    %482 = vmatpush1.msra.mxu0 %v65
    %483 = vmatprep.subr.mxu0 %v69
    %484 = vmatpush1.msra.mxu0 %v68
    %485 = vmatprep.subr.mxu0 0.0
    %486 = vmatpush1.msra.mxu0 0.0
    %487 = vmatprep.subr.mxu0 0.0
    %488 = vmatpush1.msra.mxu0 0.0
    %489 = vmatprep.subr.mxu0 0.0
    %490 = vmatpush1.msra.mxu0 0.0
    %491 = vmatprep.subr.mxu0 0.0
    %492 = vmatpush1.msra.mxu0 0.0
    %493 = vmatprep.subr.mxu0 0.0
    %494 = vmatpush1.msra.mxu0 0.0
    %495 = vmatprep.subr.mxu0 0.0
    %496 = vmatpush1.msra.mxu0 0.0
    %497 = vmatprep.subr.mxu0 0.0
    %498 = vmatpush1.msra.mxu0 0.0
    %499 = vmatprep.subr.mxu0 0.0
    %500 = vmatpush1.msra.mxu0 0.0
    %501 = vmatprep.subr.mxu0 0.0
    %502 = vmatpush1.msra.mxu0 0.0
    %503 = vmatprep.subr.mxu0 0.0
    %504 = vmatpush1.msra.mxu0 0.0
    %505 = vmatprep.subr.mxu0 0.0
    %506 = vmatpush1.msra.mxu0 0.0
    %507 = vmatprep.subr.mxu0 0.0
    %508 = vmatpush1.msra.mxu0 0.0
    %509 = vmatprep.subr.mxu0 0.0
    %510 = vmatpush1.msra.mxu0 0.0
    %511 = vmatprep.subr.mxu0 0.0
    %512 = vmatpush1.msra.mxu0 0.0
    %513 = vmatprep.subr.mxu0 0.0
    %514 = vmatpush1.msra.mxu0 0.0
    %515 = vmatprep.subr.mxu0 0.0
    %516 = vmatpush1.msra.mxu0 0.0
    %517 = vmatprep.subr.mxu0 0.0
    %518 = vmatpush1.msra.mxu0 0.0
    %519 = vmatprep.subr.mxu0 0.0
    %520 = vmatpush1.msra.mxu0 0.0
    %521 = vmatprep.subr.mxu0 0.0
    %522 = vmatpush1.msra.mxu0 0.0
    %523 = vmatprep.subr.mxu0 0.0
    %524 = vmatpush1.msra.mxu0 0.0
    %525 = vmatprep.subr.mxu0 0.0
    %526 = vmatpush1.msra.mxu0 0.0
    %527 = vmatprep.subr.mxu0 0.0
    %528 = vmatpush1.msra.mxu0 0.0
    %529 = vmatprep.subr.mxu0 0.0
    %530 = vmatpush1.msra.mxu0 0.0
    %531 = vmatprep.subr.mxu0 0.0
    %532 = vmatpush1.msra.mxu0 0.0
    %533 = vmatprep.subr.mxu0 0.0
    %534 = vmatpush1.msra.mxu0 0.0
    %535 = vmatprep.subr.mxu0 0.0
    %536 = vmatpush1.msra.mxu0 0.0
    %537 = vmatprep.subr.mxu0 0.0
    %538 = vmatpush1.msra.mxu0 0.0
    %539 = vmatprep.subr.mxu0 0.0
    %540 = vmatpush1.msra.mxu0 0.0
    %541 = vmatprep.subr.mxu0 0.0
    %542 = vmatpush1.msra.mxu0 0.0
    %543 = vmatprep.mubr.f32.mxu0 0.0
    %544 = vmatmul.mubr.f32.gmra.mrb[0].mxu0 %v477
    %v545 = vpop.f32.mrb[0].mxu0
    %v546 = vadd.f32 %v121, %v545
    %v547 = vpop.f32.mrb[0].mxu0
    %v548 = vadd.f32 %v125, %v547
    %549 = vdwg.mxu0
    %550 = vmatprep.subr.mxu0 0.0
    %551 = vmatpush1.msra.mxu0 %v64
    %552 = vmatprep.subr.mxu0 0.0
    %553 = vmatpush1.msra.mxu0 %v67
    %554 = vmatprep.subr.mxu0 0.0
    %555 = vmatpush1.msra.mxu0 %v70
    %556 = vmatprep.subr.mxu0 0.0
    %557 = vmatpush1.msra.mxu0 0.0
    %558 = vmatprep.subr.mxu0 0.0
    %559 = vmatpush1.msra.mxu0 0.0
    %560 = vmatprep.subr.mxu0 0.0
    %561 = vmatpush1.msra.mxu0 0.0
    %562 = vmatprep.subr.mxu0 0.0
    %563 = vmatpush1.msra.mxu0 0.0
    %564 = vmatprep.subr.mxu0 0.0
    %565 = vmatpush1.msra.mxu0 0.0
    %566 = vmatprep.subr.mxu0 0.0
    %567 = vmatpush1.msra.mxu0 0.0
    %568 = vmatprep.subr.mxu0 0.0
    %569 = vmatpush1.msra.mxu0 0.0
    %570 = vmatprep.subr.mxu0 0.0
    %571 = vmatpush1.msra.mxu0 0.0
    %572 = vmatprep.subr.mxu0 0.0
    %573 = vmatpush1.msra.mxu0 0.0
    %574 = vmatprep.subr.mxu0 0.0
    %575 = vmatpush1.msra.mxu0 0.0
    %576 = vmatprep.subr.mxu0 0.0
    %577 = vmatpush1.msra.mxu0 0.0
    %578 = vmatprep.subr.mxu0 0.0
    %579 = vmatpush1.msra.mxu0 0.0
    %580 = vmatprep.subr.mxu0 0.0
    %581 = vmatpush1.msra.mxu0 0.0
    %582 = vmatprep.subr.mxu0 0.0
    %583 = vmatpush1.msra.mxu0 0.0
    %584 = vmatprep.subr.mxu0 0.0
    %585 = vmatpush1.msra.mxu0 0.0
    %586 = vmatprep.subr.mxu0 0.0
    %587 = vmatpush1.msra.mxu0 0.0
    %588 = vmatprep.subr.mxu0 0.0
    %589 = vmatpush1.msra.mxu0 0.0
    %590 = vmatprep.subr.mxu0 0.0
    %591 = vmatpush1.msra.mxu0 0.0
    %592 = vmatprep.subr.mxu0 0.0
    %593 = vmatpush1.msra.mxu0 0.0
    %594 = vmatprep.subr.mxu0 0.0
    %595 = vmatpush1.msra.mxu0 0.0
    %596 = vmatprep.subr.mxu0 0.0
    %597 = vmatpush1.msra.mxu0 0.0
    %598 = vmatprep.subr.mxu0 0.0
    %599 = vmatpush1.msra.mxu0 0.0
    %600 = vmatprep.subr.mxu0 0.0
    %601 = vmatpush1.msra.mxu0 0.0
    %602 = vmatprep.subr.mxu0 0.0
    %603 = vmatpush1.msra.mxu0 0.0
    %604 = vmatprep.subr.mxu0 0.0
    %605 = vmatpush1.msra.mxu0 0.0
    %606 = vmatprep.subr.mxu0 0.0
    %607 = vmatpush1.msra.mxu0 0.0
    %608 = vmatprep.subr.mxu0 0.0
    %609 = vmatpush1.msra.mxu0 0.0
    %610 = vmatprep.subr.mxu0 0.0
    %611 = vmatpush1.msra.mxu0 0.0
    %612 = vmatprep.subr.mxu0 0.0
    %613 = vmatpush1.msra.mxu0 0.0
    %614 = vmatprep.mubr.f32.mxu0 0.0
    %615 = vmatmul.mubr.f32.gmra.mrb[0].mxu0 %v477
    %v616 = vpop.f32.mrb[0].mxu0
    %v617 = vadd.f32 %v129, %v616
    %v618 = vpop.f32.mrb[0].mxu0
    %619 = vdwg.mxu0
    %v622 = vrot.slane %v546, 6
    %v623 = vrot.slane %v548, 6
    %v626 = vadd.f32 %v114, %v622
    %v627 = vadd.f32 %v115, %v623
    %v628 = vxor.u32 %v626, 2147483648
    %v629 = vxor.u32 %v627, 2147483648
    %v630 = vmul.f32 %v628, 1.442695
    %v631 = vpow.pop %v630
    %v632 = vmul.f32 %v629, 1.442695
    %v633 = vpow.pop %v632
    %v634 = vadd.f32 %v631, 1.0
    %v635 = vadd.f32 %v633, 1.0
    %v636 = vrcp.pop %v634
    %v637 = vmul.f32 1.0, %v636
    %v638 = vrcp.pop %v635
    %v639 = vmul.f32 1.0, %v638
    %v641 = vrot.slane %v617, 6
    %v643 = vmul.f32 %v637, %v641
    %v644 = vadd.f32 %v116, %v643
    %v645 = vtanh.pop %v644
    %v646 = vsub.f32 1.0, %v639
    %v647 = vmul.f32 %v646, %v645
    %v648 = vrot.slane %v474, 7
    %v650 = vmul.f32 %v639, %v648
    %v651 = vadd.f32 %v647, %v650
    %v653 = vrot.slane %v651, 2
    %v654 = vsel %vm133, %v653, 0
    %656 = vmatprep.subr.mxu0 %v63
    %657 = vmatpush1.msra.mxu0 %v62
    %658 = vmatprep.subr.mxu0 %v66
    %659 = vmatpush1.msra.mxu0 %v65
    %660 = vmatprep.subr.mxu0 %v69
    %661 = vmatpush1.msra.mxu0 %v68
    %662 = vmatprep.subr.mxu0 0.0
    %663 = vmatpush1.msra.mxu0 0.0
    %664 = vmatprep.subr.mxu0 0.0
    %665 = vmatpush1.msra.mxu0 0.0
    %666 = vmatprep.subr.mxu0 0.0
    %667 = vmatpush1.msra.mxu0 0.0
    %668 = vmatprep.subr.mxu0 0.0
    %669 = vmatpush1.msra.mxu0 0.0
    %670 = vmatprep.subr.mxu0 0.0
    %671 = vmatpush1.msra.mxu0 0.0
    %672 = vmatprep.subr.mxu0 0.0
    %673 = vmatpush1.msra.mxu0 0.0
    %674 = vmatprep.subr.mxu0 0.0
    %675 = vmatpush1.msra.mxu0 0.0
    %676 = vmatprep.subr.mxu0 0.0
    %677 = vmatpush1.msra.mxu0 0.0
    %678 = vmatprep.subr.mxu0 0.0
    %679 = vmatpush1.msra.mxu0 0.0
    %680 = vmatprep.subr.mxu0 0.0
    %681 = vmatpush1.msra.mxu0 0.0
    %682 = vmatprep.subr.mxu0 0.0
    %683 = vmatpush1.msra.mxu0 0.0
    %684 = vmatprep.subr.mxu0 0.0
    %685 = vmatpush1.msra.mxu0 0.0
    %686 = vmatprep.subr.mxu0 0.0
    %687 = vmatpush1.msra.mxu0 0.0
    %688 = vmatprep.subr.mxu0 0.0
    %689 = vmatpush1.msra.mxu0 0.0
    %690 = vmatprep.subr.mxu0 0.0
    %691 = vmatpush1.msra.mxu0 0.0
    %692 = vmatprep.subr.mxu0 0.0
    %693 = vmatpush1.msra.mxu0 0.0
    %694 = vmatprep.subr.mxu0 0.0
    %695 = vmatpush1.msra.mxu0 0.0
    %696 = vmatprep.subr.mxu0 0.0
    %697 = vmatpush1.msra.mxu0 0.0
    %698 = vmatprep.subr.mxu0 0.0
    %699 = vmatpush1.msra.mxu0 0.0
    %700 = vmatprep.subr.mxu0 0.0
    %701 = vmatpush1.msra.mxu0 0.0
    %702 = vmatprep.subr.mxu0 0.0
    %703 = vmatpush1.msra.mxu0 0.0
    %704 = vmatprep.subr.mxu0 0.0
    %705 = vmatpush1.msra.mxu0 0.0
    %706 = vmatprep.subr.mxu0 0.0
    %707 = vmatpush1.msra.mxu0 0.0
    %708 = vmatprep.subr.mxu0 0.0
    %709 = vmatpush1.msra.mxu0 0.0
    %710 = vmatprep.subr.mxu0 0.0
    %711 = vmatpush1.msra.mxu0 0.0
    %712 = vmatprep.subr.mxu0 0.0
    %713 = vmatpush1.msra.mxu0 0.0
    %714 = vmatprep.subr.mxu0 0.0
    %715 = vmatpush1.msra.mxu0 0.0
    %716 = vmatprep.subr.mxu0 0.0
    %717 = vmatpush1.msra.mxu0 0.0
    %718 = vmatprep.subr.mxu0 0.0
    %719 = vmatpush1.msra.mxu0 0.0
    %720 = vmatprep.mubr.f32.mxu0 0.0
    %721 = vmatmul.mubr.f32.gmra.mrb[0].mxu0 %v654
    %v722 = vpop.f32.mrb[0].mxu0
    %v723 = vadd.f32 %v121, %v722
    %v724 = vpop.f32.mrb[0].mxu0
    %v725 = vadd.f32 %v125, %v724
    %726 = vdwg.mxu0
    %727 = vmatprep.subr.mxu0 0.0
    %728 = vmatpush1.msra.mxu0 %v64
    %729 = vmatprep.subr.mxu0 0.0
    %730 = vmatpush1.msra.mxu0 %v67
    %731 = vmatprep.subr.mxu0 0.0
    %732 = vmatpush1.msra.mxu0 %v70
    %733 = vmatprep.subr.mxu0 0.0
    %734 = vmatpush1.msra.mxu0 0.0
    %735 = vmatprep.subr.mxu0 0.0
    %736 = vmatpush1.msra.mxu0 0.0
    %737 = vmatprep.subr.mxu0 0.0
    %738 = vmatpush1.msra.mxu0 0.0
    %739 = vmatprep.subr.mxu0 0.0
    %740 = vmatpush1.msra.mxu0 0.0
    %741 = vmatprep.subr.mxu0 0.0
    %742 = vmatpush1.msra.mxu0 0.0
    %743 = vmatprep.subr.mxu0 0.0
    %744 = vmatpush1.msra.mxu0 0.0
    %745 = vmatprep.subr.mxu0 0.0
    %746 = vmatpush1.msra.mxu0 0.0
    %747 = vmatprep.subr.mxu0 0.0
    %748 = vmatpush1.msra.mxu0 0.0
    %749 = vmatprep.subr.mxu0 0.0
    %750 = vmatpush1.msra.mxu0 0.0
    %751 = vmatprep.subr.mxu0 0.0
    %752 = vmatpush1.msra.mxu0 0.0
    %753 = vmatprep.subr.mxu0 0.0
    %754 = vmatpush1.msra.mxu0 0.0
    %755 = vmatprep.subr.mxu0 0.0
    %756 = vmatpush1.msra.mxu0 0.0
    %757 = vmatprep.subr.mxu0 0.0
    %758 = vmatpush1.msra.mxu0 0.0
    %759 = vmatprep.subr.mxu0 0.0
    %760 = vmatpush1.msra.mxu0 0.0
    %761 = vmatprep.subr.mxu0 0.0
    %762 = vmatpush1.msra.mxu0 0.0
    %763 = vmatprep.subr.mxu0 0.0
    %764 = vmatpush1.msra.mxu0 0.0
    %765 = vmatprep.subr.mxu0 0.0
    %766 = vmatpush1.msra.mxu0 0.0
    %767 = vmatprep.subr.mxu0 0.0
    %768 = vmatpush1.msra.mxu0 0.0
    %769 = vmatprep.subr.mxu0 0.0
    %770 = vmatpush1.msra.mxu0 0.0
    %771 = vmatprep.subr.mxu0 0.0
    %772 = vmatpush1.msra.mxu0 0.0
    %773 = vmatprep.subr.mxu0 0.0
    %774 = vmatpush1.msra.mxu0 0.0
    %775 = vmatprep.subr.mxu0 0.0
    %776 = vmatpush1.msra.mxu0 0.0
    %777 = vmatprep.subr.mxu0 0.0
    %778 = vmatpush1.msra.mxu0 0.0
    %779 = vmatprep.subr.mxu0 0.0
    %780 = vmatpush1.msra.mxu0 0.0
    %781 = vmatprep.subr.mxu0 0.0
    %782 = vmatpush1.msra.mxu0 0.0
    %783 = vmatprep.subr.mxu0 0.0
    %784 = vmatpush1.msra.mxu0 0.0
    %785 = vmatprep.subr.mxu0 0.0
    %786 = vmatpush1.msra.mxu0 0.0
    %787 = vmatprep.subr.mxu0 0.0
    %788 = vmatpush1.msra.mxu0 0.0
    %789 = vmatprep.subr.mxu0 0.0
    %790 = vmatpush1.msra.mxu0 0.0
    %791 = vmatprep.mubr.f32.mxu0 0.0
    %792 = vmatmul.mubr.f32.gmra.mrb[0].mxu0 %v654
    %v793 = vpop.f32.mrb[0].mxu0
    %v794 = vadd.f32 %v129, %v793
    %v795 = vpop.f32.mrb[0].mxu0
    %796 = vdwg.mxu0
    %v799 = vrot.slane %v723, 5
    %v800 = vrot.slane %v725, 5
    %v803 = vadd.f32 %v114, %v799
    %v804 = vadd.f32 %v115, %v800
    %v805 = vxor.u32 %v803, 2147483648
    %v806 = vxor.u32 %v804, 2147483648
    %v807 = vmul.f32 %v805, 1.442695
    %v808 = vpow.pop %v807
    %v809 = vmul.f32 %v806, 1.442695
    %v810 = vpow.pop %v809
    %v811 = vadd.f32 %v808, 1.0
    %v812 = vadd.f32 %v810, 1.0
    %v813 = vrcp.pop %v811
    %v814 = vmul.f32 1.0, %v813
    %v815 = vrcp.pop %v812
    %v816 = vmul.f32 1.0, %v815
    %v818 = vrot.slane %v794, 5
    %v820 = vmul.f32 %v814, %v818
    %v821 = vadd.f32 %v116, %v820
    %v822 = vtanh.pop %v821
    %v823 = vsub.f32 1.0, %v816
    %v824 = vmul.f32 %v823, %v822
    %v825 = vrot.slane %v651, 7
    %v827 = vmul.f32 %v816, %v825
    %v828 = vadd.f32 %v824, %v827
    %v830 = vrot.slane %v828, 3
    %v831 = vsel %vm133, %v830, 0
    %833 = vmatprep.subr.mxu0 %v63
    %834 = vmatpush1.msra.mxu0 %v62
    %835 = vmatprep.subr.mxu0 %v66
    %836 = vmatpush1.msra.mxu0 %v65
    %837 = vmatprep.subr.mxu0 %v69
    %838 = vmatpush1.msra.mxu0 %v68
    %839 = vmatprep.subr.mxu0 0.0
    %840 = vmatpush1.msra.mxu0 0.0
    %841 = vmatprep.subr.mxu0 0.0
    %842 = vmatpush1.msra.mxu0 0.0
    %843 = vmatprep.subr.mxu0 0.0
    %844 = vmatpush1.msra.mxu0 0.0
    %845 = vmatprep.subr.mxu0 0.0
    %846 = vmatpush1.msra.mxu0 0.0
    %847 = vmatprep.subr.mxu0 0.0
    %848 = vmatpush1.msra.mxu0 0.0
    %849 = vmatprep.subr.mxu0 0.0
    %850 = vmatpush1.msra.mxu0 0.0
    %851 = vmatprep.subr.mxu0 0.0
    %852 = vmatpush1.msra.mxu0 0.0
    %853 = vmatprep.subr.mxu0 0.0
    %854 = vmatpush1.msra.mxu0 0.0
    %855 = vmatprep.subr.mxu0 0.0
    %856 = vmatpush1.msra.mxu0 0.0
    %857 = vmatprep.subr.mxu0 0.0
    %858 = vmatpush1.msra.mxu0 0.0
    %859 = vmatprep.subr.mxu0 0.0
    %860 = vmatpush1.msra.mxu0 0.0
    %861 = vmatprep.subr.mxu0 0.0
    %862 = vmatpush1.msra.mxu0 0.0
    %863 = vmatprep.subr.mxu0 0.0
    %864 = vmatpush1.msra.mxu0 0.0
    %865 = vmatprep.subr.mxu0 0.0
    %866 = vmatpush1.msra.mxu0 0.0
    %867 = vmatprep.subr.mxu0 0.0
    %868 = vmatpush1.msra.mxu0 0.0
    %869 = vmatprep.subr.mxu0 0.0
    %870 = vmatpush1.msra.mxu0 0.0
    %871 = vmatprep.subr.mxu0 0.0
    %872 = vmatpush1.msra.mxu0 0.0
    %873 = vmatprep.subr.mxu0 0.0
    %874 = vmatpush1.msra.mxu0 0.0
    %875 = vmatprep.subr.mxu0 0.0
    %876 = vmatpush1.msra.mxu0 0.0
    %877 = vmatprep.subr.mxu0 0.0
    %878 = vmatpush1.msra.mxu0 0.0
    %879 = vmatprep.subr.mxu0 0.0
    %880 = vmatpush1.msra.mxu0 0.0
    %881 = vmatprep.subr.mxu0 0.0
    %882 = vmatpush1.msra.mxu0 0.0
    %883 = vmatprep.subr.mxu0 0.0
    %884 = vmatpush1.msra.mxu0 0.0
    %885 = vmatprep.subr.mxu0 0.0
    %886 = vmatpush1.msra.mxu0 0.0
    %887 = vmatprep.subr.mxu0 0.0
    %888 = vmatpush1.msra.mxu0 0.0
    %889 = vmatprep.subr.mxu0 0.0
    %890 = vmatpush1.msra.mxu0 0.0
    %891 = vmatprep.subr.mxu0 0.0
    %892 = vmatpush1.msra.mxu0 0.0
    %893 = vmatprep.subr.mxu0 0.0
    %894 = vmatpush1.msra.mxu0 0.0
    %895 = vmatprep.subr.mxu0 0.0
    %896 = vmatpush1.msra.mxu0 0.0
    %897 = vmatprep.mubr.f32.mxu0 0.0
    %898 = vmatmul.mubr.f32.gmra.mrb[0].mxu0 %v831
    %v899 = vpop.f32.mrb[0].mxu0
    %v900 = vadd.f32 %v121, %v899
    %v901 = vpop.f32.mrb[0].mxu0
    %v902 = vadd.f32 %v125, %v901
    %903 = vdwg.mxu0
    %904 = vmatprep.subr.mxu0 0.0
    %905 = vmatpush1.msra.mxu0 %v64
    %906 = vmatprep.subr.mxu0 0.0
    %907 = vmatpush1.msra.mxu0 %v67
    %908 = vmatprep.subr.mxu0 0.0
    %909 = vmatpush1.msra.mxu0 %v70
    %910 = vmatprep.subr.mxu0 0.0
    %911 = vmatpush1.msra.mxu0 0.0
    %912 = vmatprep.subr.mxu0 0.0
    %913 = vmatpush1.msra.mxu0 0.0
    %914 = vmatprep.subr.mxu0 0.0
    %915 = vmatpush1.msra.mxu0 0.0
    %916 = vmatprep.subr.mxu0 0.0
    %917 = vmatpush1.msra.mxu0 0.0
    %918 = vmatprep.subr.mxu0 0.0
    %919 = vmatpush1.msra.mxu0 0.0
    %920 = vmatprep.subr.mxu0 0.0
    %921 = vmatpush1.msra.mxu0 0.0
    %922 = vmatprep.subr.mxu0 0.0
    %923 = vmatpush1.msra.mxu0 0.0
    %924 = vmatprep.subr.mxu0 0.0
    %925 = vmatpush1.msra.mxu0 0.0
    %926 = vmatprep.subr.mxu0 0.0
    %927 = vmatpush1.msra.mxu0 0.0
    %928 = vmatprep.subr.mxu0 0.0
    %929 = vmatpush1.msra.mxu0 0.0
    %930 = vmatprep.subr.mxu0 0.0
    %931 = vmatpush1.msra.mxu0 0.0
    %932 = vmatprep.subr.mxu0 0.0
    %933 = vmatpush1.msra.mxu0 0.0
    %934 = vmatprep.subr.mxu0 0.0
    %935 = vmatpush1.msra.mxu0 0.0
    %936 = vmatprep.subr.mxu0 0.0
    %937 = vmatpush1.msra.mxu0 0.0
    %938 = vmatprep.subr.mxu0 0.0
    %939 = vmatpush1.msra.mxu0 0.0
    %940 = vmatprep.subr.mxu0 0.0
    %941 = vmatpush1.msra.mxu0 0.0
    %942 = vmatprep.subr.mxu0 0.0
    %943 = vmatpush1.msra.mxu0 0.0
    %944 = vmatprep.subr.mxu0 0.0
    %945 = vmatpush1.msra.mxu0 0.0
    %946 = vmatprep.subr.mxu0 0.0
    %947 = vmatpush1.msra.mxu0 0.0
    %948 = vmatprep.subr.mxu0 0.0
    %949 = vmatpush1.msra.mxu0 0.0
    %950 = vmatprep.subr.mxu0 0.0
    %951 = vmatpush1.msra.mxu0 0.0
    %952 = vmatprep.subr.mxu0 0.0
    %953 = vmatpush1.msra.mxu0 0.0
    %954 = vmatprep.subr.mxu0 0.0
    %955 = vmatpush1.msra.mxu0 0.0
    %956 = vmatprep.subr.mxu0 0.0
    %957 = vmatpush1.msra.mxu0 0.0
    %958 = vmatprep.subr.mxu0 0.0
    %959 = vmatpush1.msra.mxu0 0.0
    %960 = vmatprep.subr.mxu0 0.0
    %961 = vmatpush1.msra.mxu0 0.0
    %962 = vmatprep.subr.mxu0 0.0
    %963 = vmatpush1.msra.mxu0 0.0
    %964 = vmatprep.subr.mxu0 0.0
    %965 = vmatpush1.msra.mxu0 0.0
    %966 = vmatprep.subr.mxu0 0.0
    %967 = vmatpush1.msra.mxu0 0.0
    %968 = vmatprep.mubr.f32.mxu0 0.0
    %969 = vmatmul.mubr.f32.gmra.mrb[0].mxu0 %v831
    %v970 = vpop.f32.mrb[0].mxu0
    %v971 = vadd.f32 %v129, %v970
    %v972 = vpop.f32.mrb[0].mxu0
    %973 = vdwg.mxu0
    %v976 = vrot.slane %v900, 4
    %v977 = vrot.slane %v902, 4
    %v980 = vadd.f32 %v114, %v976
    %v981 = vadd.f32 %v115, %v977
    %v982 = vxor.u32 %v980, 2147483648
    %v983 = vxor.u32 %v981, 2147483648
    %v984 = vmul.f32 %v982, 1.442695
    %v985 = vpow.pop %v984
    %v986 = vmul.f32 %v983, 1.442695
    %v987 = vpow.pop %v986
    %v988 = vadd.f32 %v985, 1.0
    %v989 = vadd.f32 %v987, 1.0
    %v990 = vrcp.pop %v988
    %v991 = vmul.f32 1.0, %v990
    %v992 = vrcp.pop %v989
    %v993 = vmul.f32 1.0, %v992
    %v995 = vrot.slane %v971, 4
    %v997 = vmul.f32 %v991, %v995
    %v998 = vadd.f32 %v116, %v997
    %v999 = vtanh.pop %v998
    %v1000 = vsub.f32 1.0, %v993
    %v1001 = vmul.f32 %v1000, %v999
    %v1002 = vrot.slane %v828, 7
    %v1004 = vmul.f32 %v993, %v1002
    %v1005 = vadd.f32 %v1001, %v1004
    %v1007 = vrot.slane %v1005, 4
    %v1008 = vsel %vm133, %v1007, 0
    %1010 = vmatprep.subr.mxu0 %v63
    %1011 = vmatpush1.msra.mxu0 %v62
    %1012 = vmatprep.subr.mxu0 %v66
    %1013 = vmatpush1.msra.mxu0 %v65
    %1014 = vmatprep.subr.mxu0 %v69
    %1015 = vmatpush1.msra.mxu0 %v68
    %1016 = vmatprep.subr.mxu0 0.0
    %1017 = vmatpush1.msra.mxu0 0.0
    %1018 = vmatprep.subr.mxu0 0.0
    %1019 = vmatpush1.msra.mxu0 0.0
    %1020 = vmatprep.subr.mxu0 0.0
    %1021 = vmatpush1.msra.mxu0 0.0
    %1022 = vmatprep.subr.mxu0 0.0
    %1023 = vmatpush1.msra.mxu0 0.0
    %1024 = vmatprep.subr.mxu0 0.0
    %1025 = vmatpush1.msra.mxu0 0.0
    %1026 = vmatprep.subr.mxu0 0.0
    %1027 = vmatpush1.msra.mxu0 0.0
    %1028 = vmatprep.subr.mxu0 0.0
    %1029 = vmatpush1.msra.mxu0 0.0
    %1030 = vmatprep.subr.mxu0 0.0
    %1031 = vmatpush1.msra.mxu0 0.0
    %1032 = vmatprep.subr.mxu0 0.0
    %1033 = vmatpush1.msra.mxu0 0.0
    %1034 = vmatprep.subr.mxu0 0.0
    %1035 = vmatpush1.msra.mxu0 0.0
    %1036 = vmatprep.subr.mxu0 0.0
    %1037 = vmatpush1.msra.mxu0 0.0
    %1038 = vmatprep.subr.mxu0 0.0
    %1039 = vmatpush1.msra.mxu0 0.0
    %1040 = vmatprep.subr.mxu0 0.0
    %1041 = vmatpush1.msra.mxu0 0.0
    %1042 = vmatprep.subr.mxu0 0.0
    %1043 = vmatpush1.msra.mxu0 0.0
    %1044 = vmatprep.subr.mxu0 0.0
    %1045 = vmatpush1.msra.mxu0 0.0
    %1046 = vmatprep.subr.mxu0 0.0
    %1047 = vmatpush1.msra.mxu0 0.0
    %1048 = vmatprep.subr.mxu0 0.0
    %1049 = vmatpush1.msra.mxu0 0.0
    %1050 = vmatprep.subr.mxu0 0.0
    %1051 = vmatpush1.msra.mxu0 0.0
    %1052 = vmatprep.subr.mxu0 0.0
    %1053 = vmatpush1.msra.mxu0 0.0
    %1054 = vmatprep.subr.mxu0 0.0
    %1055 = vmatpush1.msra.mxu0 0.0
    %1056 = vmatprep.subr.mxu0 0.0
    %1057 = vmatpush1.msra.mxu0 0.0
    %1058 = vmatprep.subr.mxu0 0.0
    %1059 = vmatpush1.msra.mxu0 0.0
    %1060 = vmatprep.subr.mxu0 0.0
    %1061 = vmatpush1.msra.mxu0 0.0
    %1062 = vmatprep.subr.mxu0 0.0
    %1063 = vmatpush1.msra.mxu0 0.0
    %1064 = vmatprep.subr.mxu0 0.0
    %1065 = vmatpush1.msra.mxu0 0.0
    %1066 = vmatprep.subr.mxu0 0.0
    %1067 = vmatpush1.msra.mxu0 0.0
    %1068 = vmatprep.subr.mxu0 0.0
    %1069 = vmatpush1.msra.mxu0 0.0
    %1070 = vmatprep.subr.mxu0 0.0
    %1071 = vmatpush1.msra.mxu0 0.0
    %1072 = vmatprep.subr.mxu0 0.0
    %1073 = vmatpush1.msra.mxu0 0.0
    %1074 = vmatprep.mubr.f32.mxu0 0.0
    %1075 = vmatmul.mubr.f32.gmra.mrb[0].mxu0 %v1008
    %v1076 = vpop.f32.mrb[0].mxu0
    %v1077 = vadd.f32 %v121, %v1076
    %v1078 = vpop.f32.mrb[0].mxu0
    %v1079 = vadd.f32 %v125, %v1078
    %1080 = vdwg.mxu0
    %1081 = vmatprep.subr.mxu0 0.0
    %1082 = vmatpush1.msra.mxu0 %v64
    %1083 = vmatprep.subr.mxu0 0.0
    %1084 = vmatpush1.msra.mxu0 %v67
    %1085 = vmatprep.subr.mxu0 0.0
    %1086 = vmatpush1.msra.mxu0 %v70
    %1087 = vmatprep.subr.mxu0 0.0
    %1088 = vmatpush1.msra.mxu0 0.0
    %1089 = vmatprep.subr.mxu0 0.0
    %1090 = vmatpush1.msra.mxu0 0.0
    %1091 = vmatprep.subr.mxu0 0.0
    %1092 = vmatpush1.msra.mxu0 0.0
    %1093 = vmatprep.subr.mxu0 0.0
    %1094 = vmatpush1.msra.mxu0 0.0
    %1095 = vmatprep.subr.mxu0 0.0
    %1096 = vmatpush1.msra.mxu0 0.0
    %1097 = vmatprep.subr.mxu0 0.0
    %1098 = vmatpush1.msra.mxu0 0.0
    %1099 = vmatprep.subr.mxu0 0.0
    %1100 = vmatpush1.msra.mxu0 0.0
    %1101 = vmatprep.subr.mxu0 0.0
    %1102 = vmatpush1.msra.mxu0 0.0
    %1103 = vmatprep.subr.mxu0 0.0
    %1104 = vmatpush1.msra.mxu0 0.0
    %1105 = vmatprep.subr.mxu0 0.0
    %1106 = vmatpush1.msra.mxu0 0.0
    %1107 = vmatprep.subr.mxu0 0.0
    %1108 = vmatpush1.msra.mxu0 0.0
    %1109 = vmatprep.subr.mxu0 0.0
    %1110 = vmatpush1.msra.mxu0 0.0
    %1111 = vmatprep.subr.mxu0 0.0
    %1112 = vmatpush1.msra.mxu0 0.0
    %1113 = vmatprep.subr.mxu0 0.0
    %1114 = vmatpush1.msra.mxu0 0.0
    %1115 = vmatprep.subr.mxu0 0.0
    %1116 = vmatpush1.msra.mxu0 0.0
    %1117 = vmatprep.subr.mxu0 0.0
    %1118 = vmatpush1.msra.mxu0 0.0
    %1119 = vmatprep.subr.mxu0 0.0
    %1120 = vmatpush1.msra.mxu0 0.0
    %1121 = vmatprep.subr.mxu0 0.0
    %1122 = vmatpush1.msra.mxu0 0.0
    %1123 = vmatprep.subr.mxu0 0.0
    %1124 = vmatpush1.msra.mxu0 0.0
    %1125 = vmatprep.subr.mxu0 0.0
    %1126 = vmatpush1.msra.mxu0 0.0
    %1127 = vmatprep.subr.mxu0 0.0
    %1128 = vmatpush1.msra.mxu0 0.0
    %1129 = vmatprep.subr.mxu0 0.0
    %1130 = vmatpush1.msra.mxu0 0.0
    %1131 = vmatprep.subr.mxu0 0.0
    %1132 = vmatpush1.msra.mxu0 0.0
    %1133 = vmatprep.subr.mxu0 0.0
    %1134 = vmatpush1.msra.mxu0 0.0
    %1135 = vmatprep.subr.mxu0 0.0
    %1136 = vmatpush1.msra.mxu0 0.0
    %1137 = vmatprep.subr.mxu0 0.0
    %1138 = vmatpush1.msra.mxu0 0.0
    %1139 = vmatprep.subr.mxu0 0.0
    %1140 = vmatpush1.msra.mxu0 0.0
    %1141 = vmatprep.subr.mxu0 0.0
    %1142 = vmatpush1.msra.mxu0 0.0
    %1143 = vmatprep.subr.mxu0 0.0
    %1144 = vmatpush1.msra.mxu0 0.0
    %1145 = vmatprep.mubr.f32.mxu0 0.0
    %1146 = vmatmul.mubr.f32.gmra.mrb[0].mxu0 %v1008
    %v1147 = vpop.f32.mrb[0].mxu0
    %v1148 = vadd.f32 %v129, %v1147
    %v1149 = vpop.f32.mrb[0].mxu0
    %1150 = vdwg.mxu0
    %v1153 = vrot.slane %v1077, 3
    %v1154 = vrot.slane %v1079, 3
    %v1157 = vadd.f32 %v114, %v1153
    %v1158 = vadd.f32 %v115, %v1154
    %v1159 = vxor.u32 %v1157, 2147483648
    %v1160 = vxor.u32 %v1158, 2147483648
    %v1161 = vmul.f32 %v1159, 1.442695
    %v1162 = vpow.pop %v1161
    %v1163 = vmul.f32 %v1160, 1.442695
    %v1164 = vpow.pop %v1163
    %v1165 = vadd.f32 %v1162, 1.0
    %v1166 = vadd.f32 %v1164, 1.0
    %v1167 = vrcp.pop %v1165
    %v1168 = vmul.f32 1.0, %v1167
    %v1169 = vrcp.pop %v1166
    %v1170 = vmul.f32 1.0, %v1169
    %v1172 = vrot.slane %v1148, 3
    %v1174 = vmul.f32 %v1168, %v1172
    %v1175 = vadd.f32 %v116, %v1174
    %v1176 = vtanh.pop %v1175
    %v1177 = vsub.f32 1.0, %v1170
    %v1178 = vmul.f32 %v1177, %v1176
    %v1179 = vrot.slane %v1005, 7
    %v1181 = vmul.f32 %v1170, %v1179
    %v1182 = vadd.f32 %v1178, %v1181
    %v1184 = vrot.slane %v1182, 5
    %v1185 = vsel %vm133, %v1184, 0
    %1187 = vmatprep.subr.mxu0 %v63
    %1188 = vmatpush1.msra.mxu0 %v62
    %1189 = vmatprep.subr.mxu0 %v66
    %1190 = vmatpush1.msra.mxu0 %v65
    %1191 = vmatprep.subr.mxu0 %v69
    %1192 = vmatpush1.msra.mxu0 %v68
    %1193 = vmatprep.subr.mxu0 0.0
    %1194 = vmatpush1.msra.mxu0 0.0
    %1195 = vmatprep.subr.mxu0 0.0
    %1196 = vmatpush1.msra.mxu0 0.0
    %1197 = vmatprep.subr.mxu0 0.0
    %1198 = vmatpush1.msra.mxu0 0.0
    %1199 = vmatprep.subr.mxu0 0.0
    %1200 = vmatpush1.msra.mxu0 0.0
    %1201 = vmatprep.subr.mxu0 0.0
    %1202 = vmatpush1.msra.mxu0 0.0
    %1203 = vmatprep.subr.mxu0 0.0
    %1204 = vmatpush1.msra.mxu0 0.0
    %1205 = vmatprep.subr.mxu0 0.0
    %1206 = vmatpush1.msra.mxu0 0.0
    %1207 = vmatprep.subr.mxu0 0.0
    %1208 = vmatpush1.msra.mxu0 0.0
    %1209 = vmatprep.subr.mxu0 0.0
    %1210 = vmatpush1.msra.mxu0 0.0
    %1211 = vmatprep.subr.mxu0 0.0
    %1212 = vmatpush1.msra.mxu0 0.0
    %1213 = vmatprep.subr.mxu0 0.0
    %1214 = vmatpush1.msra.mxu0 0.0
    %1215 = vmatprep.subr.mxu0 0.0
    %1216 = vmatpush1.msra.mxu0 0.0
    %1217 = vmatprep.subr.mxu0 0.0
    %1218 = vmatpush1.msra.mxu0 0.0
    %1219 = vmatprep.subr.mxu0 0.0
    %1220 = vmatpush1.msra.mxu0 0.0
    %1221 = vmatprep.subr.mxu0 0.0
    %1222 = vmatpush1.msra.mxu0 0.0
    %1223 = vmatprep.subr.mxu0 0.0
    %1224 = vmatpush1.msra.mxu0 0.0
    %1225 = vmatprep.subr.mxu0 0.0
    %1226 = vmatpush1.msra.mxu0 0.0
    %1227 = vmatprep.subr.mxu0 0.0
    %1228 = vmatpush1.msra.mxu0 0.0
    %1229 = vmatprep.subr.mxu0 0.0
    %1230 = vmatpush1.msra.mxu0 0.0
    %1231 = vmatprep.subr.mxu0 0.0
    %1232 = vmatpush1.msra.mxu0 0.0
    %1233 = vmatprep.subr.mxu0 0.0
    %1234 = vmatpush1.msra.mxu0 0.0
    %1235 = vmatprep.subr.mxu0 0.0
    %1236 = vmatpush1.msra.mxu0 0.0
    %1237 = vmatprep.subr.mxu0 0.0
    %1238 = vmatpush1.msra.mxu0 0.0
    %1239 = vmatprep.subr.mxu0 0.0
    %1240 = vmatpush1.msra.mxu0 0.0
    %1241 = vmatprep.subr.mxu0 0.0
    %1242 = vmatpush1.msra.mxu0 0.0
    %1243 = vmatprep.subr.mxu0 0.0
    %1244 = vmatpush1.msra.mxu0 0.0
    %1245 = vmatprep.subr.mxu0 0.0
    %1246 = vmatpush1.msra.mxu0 0.0
    %1247 = vmatprep.subr.mxu0 0.0
    %1248 = vmatpush1.msra.mxu0 0.0
    %1249 = vmatprep.subr.mxu0 0.0
    %1250 = vmatpush1.msra.mxu0 0.0
    %1251 = vmatprep.mubr.f32.mxu0 0.0
    %1252 = vmatmul.mubr.f32.gmra.mrb[0].mxu0 %v1185
    %v1253 = vpop.f32.mrb[0].mxu0
    %v1254 = vadd.f32 %v121, %v1253
    %v1255 = vpop.f32.mrb[0].mxu0
    %v1256 = vadd.f32 %v125, %v1255
    %1257 = vdwg.mxu0
    %1258 = vmatprep.subr.mxu0 0.0
    %1259 = vmatpush1.msra.mxu0 %v64
    %1260 = vmatprep.subr.mxu0 0.0
    %1261 = vmatpush1.msra.mxu0 %v67
    %1262 = vmatprep.subr.mxu0 0.0
    %1263 = vmatpush1.msra.mxu0 %v70
    %1264 = vmatprep.subr.mxu0 0.0
    %1265 = vmatpush1.msra.mxu0 0.0
    %1266 = vmatprep.subr.mxu0 0.0
    %1267 = vmatpush1.msra.mxu0 0.0
    %1268 = vmatprep.subr.mxu0 0.0
    %1269 = vmatpush1.msra.mxu0 0.0
    %1270 = vmatprep.subr.mxu0 0.0
    %1271 = vmatpush1.msra.mxu0 0.0
    %1272 = vmatprep.subr.mxu0 0.0
    %1273 = vmatpush1.msra.mxu0 0.0
    %1274 = vmatprep.subr.mxu0 0.0
    %1275 = vmatpush1.msra.mxu0 0.0
    %1276 = vmatprep.subr.mxu0 0.0
    %1277 = vmatpush1.msra.mxu0 0.0
    %1278 = vmatprep.subr.mxu0 0.0
    %1279 = vmatpush1.msra.mxu0 0.0
    %1280 = vmatprep.subr.mxu0 0.0
    %1281 = vmatpush1.msra.mxu0 0.0
    %1282 = vmatprep.subr.mxu0 0.0
    %1283 = vmatpush1.msra.mxu0 0.0
    %1284 = vmatprep.subr.mxu0 0.0
    %1285 = vmatpush1.msra.mxu0 0.0
    %1286 = vmatprep.subr.mxu0 0.0
    %1287 = vmatpush1.msra.mxu0 0.0
    %1288 = vmatprep.subr.mxu0 0.0
    %1289 = vmatpush1.msra.mxu0 0.0
    %1290 = vmatprep.subr.mxu0 0.0
    %1291 = vmatpush1.msra.mxu0 0.0
    %1292 = vmatprep.subr.mxu0 0.0
    %1293 = vmatpush1.msra.mxu0 0.0
    %1294 = vmatprep.subr.mxu0 0.0
    %1295 = vmatpush1.msra.mxu0 0.0
    %1296 = vmatprep.subr.mxu0 0.0
    %1297 = vmatpush1.msra.mxu0 0.0
    %1298 = vmatprep.subr.mxu0 0.0
    %1299 = vmatpush1.msra.mxu0 0.0
    %1300 = vmatprep.subr.mxu0 0.0
    %1301 = vmatpush1.msra.mxu0 0.0
    %1302 = vmatprep.subr.mxu0 0.0
    %1303 = vmatpush1.msra.mxu0 0.0
    %1304 = vmatprep.subr.mxu0 0.0
    %1305 = vmatpush1.msra.mxu0 0.0
    %1306 = vmatprep.subr.mxu0 0.0
    %1307 = vmatpush1.msra.mxu0 0.0
    %1308 = vmatprep.subr.mxu0 0.0
    %1309 = vmatpush1.msra.mxu0 0.0
    %1310 = vmatprep.subr.mxu0 0.0
    %1311 = vmatpush1.msra.mxu0 0.0
    %1312 = vmatprep.subr.mxu0 0.0
    %1313 = vmatpush1.msra.mxu0 0.0
    %1314 = vmatprep.subr.mxu0 0.0
    %1315 = vmatpush1.msra.mxu0 0.0
    %1316 = vmatprep.subr.mxu0 0.0
    %1317 = vmatpush1.msra.mxu0 0.0
    %1318 = vmatprep.subr.mxu0 0.0
    %1319 = vmatpush1.msra.mxu0 0.0
    %1320 = vmatprep.subr.mxu0 0.0
    %1321 = vmatpush1.msra.mxu0 0.0
    %1322 = vmatprep.mubr.f32.mxu0 0.0
    %1323 = vmatmul.mubr.f32.gmra.mrb[0].mxu0 %v1185
    %v1324 = vpop.f32.mrb[0].mxu0
    %v1325 = vadd.f32 %v129, %v1324
    %v1326 = vpop.f32.mrb[0].mxu0
    %1327 = vdwg.mxu0
    %v1330 = vrot.slane %v1254, 2
    %v1331 = vrot.slane %v1256, 2
    %v1334 = vadd.f32 %v114, %v1330
    %v1335 = vadd.f32 %v115, %v1331
    %v1336 = vxor.u32 %v1334, 2147483648
    %v1337 = vxor.u32 %v1335, 2147483648
    %v1338 = vmul.f32 %v1336, 1.442695
    %v1339 = vpow.pop %v1338
    %v1340 = vmul.f32 %v1337, 1.442695
    %v1341 = vpow.pop %v1340
    %v1342 = vadd.f32 %v1339, 1.0
    %v1343 = vadd.f32 %v1341, 1.0
    %v1344 = vrcp.pop %v1342
    %v1345 = vmul.f32 1.0, %v1344
    %v1346 = vrcp.pop %v1343
    %v1347 = vmul.f32 1.0, %v1346
    %v1349 = vrot.slane %v1325, 2
    %v1351 = vmul.f32 %v1345, %v1349
    %v1352 = vadd.f32 %v116, %v1351
    %v1353 = vtanh.pop %v1352
    %v1354 = vsub.f32 1.0, %v1347
    %v1355 = vmul.f32 %v1354, %v1353
    %v1356 = vrot.slane %v1182, 7
    %v1358 = vmul.f32 %v1347, %v1356
    %v1359 = vadd.f32 %v1355, %v1358
    %v1361 = vrot.slane %v1359, 6
    %v1362 = vsel %vm133, %v1361, 0
    %1364 = vmatprep.subr.mxu0 %v63
    %1365 = vmatpush1.msra.mxu0 %v62
    %1366 = vmatprep.subr.mxu0 %v66
    %1367 = vmatpush1.msra.mxu0 %v65
    %1368 = vmatprep.subr.mxu0 %v69
    %1369 = vmatpush1.msra.mxu0 %v68
    %1370 = vmatprep.subr.mxu0 0.0
    %1371 = vmatpush1.msra.mxu0 0.0
    %1372 = vmatprep.subr.mxu0 0.0
    %1373 = vmatpush1.msra.mxu0 0.0
    %1374 = vmatprep.subr.mxu0 0.0
    %1375 = vmatpush1.msra.mxu0 0.0
    %1376 = vmatprep.subr.mxu0 0.0
    %1377 = vmatpush1.msra.mxu0 0.0
    %1378 = vmatprep.subr.mxu0 0.0
    %1379 = vmatpush1.msra.mxu0 0.0
    %1380 = vmatprep.subr.mxu0 0.0
    %1381 = vmatpush1.msra.mxu0 0.0
    %1382 = vmatprep.subr.mxu0 0.0
    %1383 = vmatpush1.msra.mxu0 0.0
    %1384 = vmatprep.subr.mxu0 0.0
    %1385 = vmatpush1.msra.mxu0 0.0
    %1386 = vmatprep.subr.mxu0 0.0
    %1387 = vmatpush1.msra.mxu0 0.0
    %1388 = vmatprep.subr.mxu0 0.0
    %1389 = vmatpush1.msra.mxu0 0.0
    %1390 = vmatprep.subr.mxu0 0.0
    %1391 = vmatpush1.msra.mxu0 0.0
    %1392 = vmatprep.subr.mxu0 0.0
    %1393 = vmatpush1.msra.mxu0 0.0
    %1394 = vmatprep.subr.mxu0 0.0
    %1395 = vmatpush1.msra.mxu0 0.0
    %1396 = vmatprep.subr.mxu0 0.0
    %1397 = vmatpush1.msra.mxu0 0.0
    %1398 = vmatprep.subr.mxu0 0.0
    %1399 = vmatpush1.msra.mxu0 0.0
    %1400 = vmatprep.subr.mxu0 0.0
    %1401 = vmatpush1.msra.mxu0 0.0
    %1402 = vmatprep.subr.mxu0 0.0
    %1403 = vmatpush1.msra.mxu0 0.0
    %1404 = vmatprep.subr.mxu0 0.0
    %1405 = vmatpush1.msra.mxu0 0.0
    %1406 = vmatprep.subr.mxu0 0.0
    %1407 = vmatpush1.msra.mxu0 0.0
    %1408 = vmatprep.subr.mxu0 0.0
    %1409 = vmatpush1.msra.mxu0 0.0
    %1410 = vmatprep.subr.mxu0 0.0
    %1411 = vmatpush1.msra.mxu0 0.0
    %1412 = vmatprep.subr.mxu0 0.0
    %1413 = vmatpush1.msra.mxu0 0.0
    %1414 = vmatprep.subr.mxu0 0.0
    %1415 = vmatpush1.msra.mxu0 0.0
    %1416 = vmatprep.subr.mxu0 0.0
    %1417 = vmatpush1.msra.mxu0 0.0
    %1418 = vmatprep.subr.mxu0 0.0
    %1419 = vmatpush1.msra.mxu0 0.0
    %1420 = vmatprep.subr.mxu0 0.0
    %1421 = vmatpush1.msra.mxu0 0.0
    %1422 = vmatprep.subr.mxu0 0.0
    %1423 = vmatpush1.msra.mxu0 0.0
    %1424 = vmatprep.subr.mxu0 0.0
    %1425 = vmatpush1.msra.mxu0 0.0
    %1426 = vmatprep.subr.mxu0 0.0
    %1427 = vmatpush1.msra.mxu0 0.0
    %1428 = vmatprep.mubr.f32.mxu0 0.0
    %1429 = vmatmul.mubr.f32.gmra.mrb[0].mxu0 %v1362
    %v1430 = vpop.f32.mrb[0].mxu0
    %v1431 = vadd.f32 %v121, %v1430
    %v1432 = vpop.f32.mrb[0].mxu0
    %v1433 = vadd.f32 %v125, %v1432
    %1434 = vdwg.mxu0
    %1435 = vmatprep.subr.mxu0 0.0
    %1436 = vmatpush1.msra.mxu0 %v64
    %1437 = vmatprep.subr.mxu0 0.0
    %1438 = vmatpush1.msra.mxu0 %v67
    %1439 = vmatprep.subr.mxu0 0.0
    %1440 = vmatpush1.msra.mxu0 %v70
    %1441 = vmatprep.subr.mxu0 0.0
    %1442 = vmatpush1.msra.mxu0 0.0
    %1443 = vmatprep.subr.mxu0 0.0
    %1444 = vmatpush1.msra.mxu0 0.0
    %1445 = vmatprep.subr.mxu0 0.0
    %1446 = vmatpush1.msra.mxu0 0.0
    %1447 = vmatprep.subr.mxu0 0.0
    %1448 = vmatpush1.msra.mxu0 0.0
    %1449 = vmatprep.subr.mxu0 0.0
    %1450 = vmatpush1.msra.mxu0 0.0
    %1451 = vmatprep.subr.mxu0 0.0
    %1452 = vmatpush1.msra.mxu0 0.0
    %1453 = vmatprep.subr.mxu0 0.0
    %1454 = vmatpush1.msra.mxu0 0.0
    %1455 = vmatprep.subr.mxu0 0.0
    %1456 = vmatpush1.msra.mxu0 0.0
    %1457 = vmatprep.subr.mxu0 0.0
    %1458 = vmatpush1.msra.mxu0 0.0
    %1459 = vmatprep.subr.mxu0 0.0
    %1460 = vmatpush1.msra.mxu0 0.0
    %1461 = vmatprep.subr.mxu0 0.0
    %1462 = vmatpush1.msra.mxu0 0.0
    %1463 = vmatprep.subr.mxu0 0.0
    %1464 = vmatpush1.msra.mxu0 0.0
    %1465 = vmatprep.subr.mxu0 0.0
    %1466 = vmatpush1.msra.mxu0 0.0
    %1467 = vmatprep.subr.mxu0 0.0
    %1468 = vmatpush1.msra.mxu0 0.0
    %1469 = vmatprep.subr.mxu0 0.0
    %1470 = vmatpush1.msra.mxu0 0.0
    %1471 = vmatprep.subr.mxu0 0.0
    %1472 = vmatpush1.msra.mxu0 0.0
    %1473 = vmatprep.subr.mxu0 0.0
    %1474 = vmatpush1.msra.mxu0 0.0
    %1475 = vmatprep.subr.mxu0 0.0
    %1476 = vmatpush1.msra.mxu0 0.0
    %1477 = vmatprep.subr.mxu0 0.0
    %1478 = vmatpush1.msra.mxu0 0.0
    %1479 = vmatprep.subr.mxu0 0.0
    %1480 = vmatpush1.msra.mxu0 0.0
    %1481 = vmatprep.subr.mxu0 0.0
    %1482 = vmatpush1.msra.mxu0 0.0
    %1483 = vmatprep.subr.mxu0 0.0
    %1484 = vmatpush1.msra.mxu0 0.0
    %1485 = vmatprep.subr.mxu0 0.0
    %1486 = vmatpush1.msra.mxu0 0.0
    %1487 = vmatprep.subr.mxu0 0.0
    %1488 = vmatpush1.msra.mxu0 0.0
    %1489 = vmatprep.subr.mxu0 0.0
    %1490 = vmatpush1.msra.mxu0 0.0
    %1491 = vmatprep.subr.mxu0 0.0
    %1492 = vmatpush1.msra.mxu0 0.0
    %1493 = vmatprep.subr.mxu0 0.0
    %1494 = vmatpush1.msra.mxu0 0.0
    %1495 = vmatprep.subr.mxu0 0.0
    %1496 = vmatpush1.msra.mxu0 0.0
    %1497 = vmatprep.subr.mxu0 0.0
    %1498 = vmatpush1.msra.mxu0 0.0
    %1499 = vmatprep.mubr.f32.mxu0 0.0
    %1500 = vmatmul.mubr.f32.gmra.mrb[0].mxu0 %v1362
    %v1501 = vpop.f32.mrb[0].mxu0
    %v1502 = vadd.f32 %v129, %v1501
    %v1503 = vpop.f32.mrb[0].mxu0
    %1504 = vdwg.mxu0
    %v1507 = vrot.slane %v1431, 1
    %v1508 = vrot.slane %v1433, 1
    %v1511 = vadd.f32 %v114, %v1507
    %v1512 = vadd.f32 %v115, %v1508
    %v1513 = vxor.u32 %v1511, 2147483648
    %v1514 = vxor.u32 %v1512, 2147483648
    %v1515 = vmul.f32 %v1513, 1.442695
    %v1516 = vpow.pop %v1515
    %v1517 = vmul.f32 %v1514, 1.442695
    %v1518 = vpow.pop %v1517
    %v1519 = vadd.f32 %v1516, 1.0
    %v1520 = vadd.f32 %v1518, 1.0
    %v1521 = vrcp.pop %v1519
    %v1522 = vmul.f32 1.0, %v1521
    %v1523 = vrcp.pop %v1520
    %v1524 = vmul.f32 1.0, %v1523
    %v1526 = vrot.slane %v1502, 1
    %v1528 = vmul.f32 %v1522, %v1526
    %v1529 = vadd.f32 %v116, %v1528
    %v1530 = vtanh.pop %v1529
    %v1531 = vsub.f32 1.0, %v1524
    %v1532 = vmul.f32 %v1531, %v1530
    %v1533 = vrot.slane %v1359, 7
    %v1535 = vmul.f32 %v1524, %v1533
    %v1536 = vadd.f32 %v1532, %v1535
    %vm1537 = vcmask 1040384
    %v1538 = vsel %vm1537, %v298, %v474
    %vm1539 = vcmask 1041408
    %v1540 = vsel %vm1539, %v1538, %v651
    %vm1541 = vcmask 1042432
    %v1542 = vsel %vm1541, %v1540, %v828
    %vm1543 = vcmask 1043456
    %v1544 = vsel %vm1543, %v1542, %v1005
    %vm1545 = vcmask 1044480
    %v1546 = vsel %vm1545, %v1544, %v1182
    %vm1547 = vcmask 1045504
    %v1548 = vsel %vm1547, %v1546, %v1359
    %vm1549 = vcmask 1046528
    %v1550 = vsel %vm1549, %v1548, %v1536
    %1551 = vst [vmem:[#allocation8] sm:$0xff] %v1550
    %1552 = vst [vmem:[#allocation2 - $0x7] sm:$0x80] %v1536
    %v1553 = vld [vmem:[#allocation8] sm:$0xff]
    %v1554 = vld [vmem:[#allocation6] sm:$0xff]
    %v1555 = vld [vmem:[#allocation6 + $0x8] sm:$0xff]
    %v1556 = vld [vmem:[#allocation6 + $0x10] sm:$0xff]
    %v1557 = vld [vmem:[#allocation6 + $0x18] sm:$0xff]
    %v1558 = vld [vmem:[#allocation6 + $0x20] sm:$0xff]
    %v1559 = vld [vmem:[#allocation6 + $0x28] sm:$0xff]
    %v1560 = vld [vmem:[#allocation6 + $0x30] sm:$0xff]
    %v1561 = vld [vmem:[#allocation6 + $0x38] sm:$0xff]
    %v1562 = vld [vmem:[#allocation6 + $0x40] sm:$0xff]
    %v1563 = vld [vmem:[#allocation6 + $0x48] sm:$0xff]
    %v1564 = vld [vmem:[#allocation6 + $0x50] sm:$0xff]
    %v1565 = vld [vmem:[#allocation6 + $0x58] sm:$0xff]
    %v1566 = vld [vmem:[#allocation6 + $0x60] sm:$0xff]
    %v1567 = vld [vmem:[#allocation6 + $0x68] sm:$0xff]
    %v1568 = vld [vmem:[#allocation6 + $0x70] sm:$0xff]
    %v1569 = vld [vmem:[#allocation6 + $0x78] sm:$0xff]
    %v1570 = vld [vmem:[%s6] sm:$0x1]
    %v1572 = vlaneseq
    %v1573 = vshrl.u32 %v1572, 7
    %v1574 = vsub.s32 0, %v1573
    %v1575 = vrot.slane %v1570, %v1574
    %1577 = vmatprep.subr.mxu0 0.0
    %1578 = vmatpush1.msra.mxu0 %v1554
    %1579 = vmatprep.subr.mxu0 0.0
    %1580 = vmatpush1.msra.mxu0 %v1555
    %1581 = vmatprep.subr.mxu0 0.0
    %1582 = vmatpush1.msra.mxu0 %v1556
    %1583 = vmatprep.subr.mxu0 0.0
    %1584 = vmatpush1.msra.mxu0 %v1557
    %1585 = vmatprep.subr.mxu0 0.0
    %1586 = vmatpush1.msra.mxu0 %v1558
    %1587 = vmatprep.subr.mxu0 0.0
    %1588 = vmatpush1.msra.mxu0 %v1559
    %1589 = vmatprep.subr.mxu0 0.0
    %1590 = vmatpush1.msra.mxu0 %v1560
    %1591 = vmatprep.subr.mxu0 0.0
    %1592 = vmatpush1.msra.mxu0 %v1561
    %1593 = vmatprep.subr.mxu0 0.0
    %1594 = vmatpush1.msra.mxu0 %v1562
    %1595 = vmatprep.subr.mxu0 0.0
    %1596 = vmatpush1.msra.mxu0 %v1563
    %1597 = vmatprep.subr.mxu0 0.0
    %1598 = vmatpush1.msra.mxu0 %v1564
    %1599 = vmatprep.subr.mxu0 0.0
    %1600 = vmatpush1.msra.mxu0 %v1565
    %1601 = vmatprep.subr.mxu0 0.0
    %1602 = vmatpush1.msra.mxu0 %v1566
    %1603 = vmatprep.subr.mxu0 0.0
    %1604 = vmatpush1.msra.mxu0 %v1567
    %1605 = vmatprep.subr.mxu0 0.0
    %1606 = vmatpush1.msra.mxu0 %v1568
    %1607 = vmatprep.subr.mxu0 0.0
    %1608 = vmatpush1.msra.mxu0 %v1569
    %1609 = vmatprep.subr.mxu0 0.0
    %1610 = vmatpush1.msra.mxu0 0.0
    %1611 = vmatprep.subr.mxu0 0.0
    %1612 = vmatpush1.msra.mxu0 0.0
    %1613 = vmatprep.subr.mxu0 0.0
    %1614 = vmatpush1.msra.mxu0 0.0
    %1615 = vmatprep.subr.mxu0 0.0
    %1616 = vmatpush1.msra.mxu0 0.0
    %1617 = vmatprep.subr.mxu0 0.0
    %1618 = vmatpush1.msra.mxu0 0.0
    %1619 = vmatprep.subr.mxu0 0.0
    %1620 = vmatpush1.msra.mxu0 0.0
    %1621 = vmatprep.subr.mxu0 0.0
    %1622 = vmatpush1.msra.mxu0 0.0
    %1623 = vmatprep.subr.mxu0 0.0
    %1624 = vmatpush1.msra.mxu0 0.0
    %1625 = vmatprep.subr.mxu0 0.0
    %1626 = vmatpush1.msra.mxu0 0.0
    %1627 = vmatprep.subr.mxu0 0.0
    %1628 = vmatpush1.msra.mxu0 0.0
    %1629 = vmatprep.subr.mxu0 0.0
    %1630 = vmatpush1.msra.mxu0 0.0
    %1631 = vmatprep.subr.mxu0 0.0
    %1632 = vmatpush1.msra.mxu0 0.0
    %1633 = vmatprep.subr.mxu0 0.0
    %1634 = vmatpush1.msra.mxu0 0.0
    %1635 = vmatprep.subr.mxu0 0.0
    %1636 = vmatpush1.msra.mxu0 0.0
    %1637 = vmatprep.subr.mxu0 0.0
    %1638 = vmatpush1.msra.mxu0 0.0
    %1639 = vmatprep.subr.mxu0 0.0
    %1640 = vmatpush1.msra.mxu0 0.0
    %1641 = vmatprep.mubr.f32.mxu0 0.0
    %1642 = vmatmul.mubr.f32.gmra.mrb[0].mxu0 %v1553
    %v1643 = vpop.f32.mrb[0].mxu0
    %v1644 = vadd.f32 %v1575, %v1643
    %v1645 = vpop.f32.mrb[0].mxu0
    %1646 = vdwg.mxu0
    %1647 = vst [vmem:[#allocation8] sm:$0xff] %v1644
    // Predicated region
    $region42: #{tpu_custom_call.1} parent=1 // pred_check
      _
    $region43: #{tpu_custom_call.1} parent=1 // pred_check_branch
      %1649 = sbr.rel (0) target = $region45
    $region44: #{tpu_custom_call.1} parent=1 // pred_region
      %s1651 = ssub.s32 128, 128
      %1652 = vsyncadd [#allocation5], %s1651
      %s1654 = sshll.u32 [#allocation8], 4
      %s1655 = int_to_ptr.vmem [resolvable:$true] %s1654
      %1657 = dma.vmem_to_hbm [thread:$0]  %s1655, 128, %s7, [#allocation5]
    $region45: #{tpu_custom_call.1} parent=1 // pred_fallthru
      _
    // Predicated region
    $region46: #{tpu_custom_call.1} parent=1 // pred_check
      _
    $region47: #{tpu_custom_call.1} parent=1 // pred_check_branch
      %1659 = sbr.rel (0) target = $region49
    $region48: #{tpu_custom_call.1} parent=1 // pred_region
      %1660 = dma.done [#allocation5], 128
    $region49: #{tpu_custom_call.1} parent=1 // pred_fallthru
      _
    %1661 = vsyncpa [#allocation4], 1
    %1662 = vsyncpa [#allocation7], 1
    %1663 = vsyncpa [#allocation5], 1

</llo_original>
